<compile_context>
chip_gen: v7x
topology: tpu7x:2x2x1
jax: 0.10.0
libtpu: 0.0.40
codegen_flags: <defaults>
</compile_context>

<pallas_src>
import functools

import numpy as np
import jax
import jax.numpy as jnp
from jax.experimental import pallas as pl
from jax.experimental.pallas import tpu as pltpu


def _round_up(v, m):
    return ((v + m - 1) // m) * m


def _roll_next(x, in_f, width):
    """Align slab j+1 onto slab j: result[:, m] = x[:, (m + in_f) % width].

    Positive shift (width - in_f) is mathematically identical to shift=-in_f
    under np.roll semantics.  pltpu.roll rides the XLU slot; fall back to
    jnp.roll (static slices + concat) if the width is not lane-friendly.
    """
    shift = width - in_f
    if width % 128 == 0:
        return pltpu.roll(x, shift=shift, axis=1)
    return jnp.roll(x, shift=shift, axis=1)


# ----------------------------------------------------------------------------
# Fused multi-layer KAN kernel.
#   refs = (bw_0, sw_0, bw_1, sw_1, ..., out_ref)
#     bw_l: [IN_l, OUTp_l]          bf16 base weight (pre-transposed)
#     sw_l: [n_knots*IN_l, OUTp_l]  bf16 spline weight (scaler folded, row index
#            = basis_index*IN + feature, zero rows for basis_index >= K)
#   layer_meta: tuple of (t0, h_step, n_knots) per layer (uniform knot grid,
#   baked in as compile-time scalars — no grid operand, no divides).
# ----------------------------------------------------------------------------
def kan_fused_kernel(x_ref, *refs, layer_meta, spline_order):
    out_ref = refs[-1]
    w_refs = refs[:-1]

    h = x_ref[...].astype(jnp.float32)                         # [TB, IN_0]
    for l, (t0, h_step, n_knots) in enumerate(layer_meta):
        bw = w_refs[2 * l][...]                                # bf16 [IN, OUTp]
        sw = w_refs[2 * l + 1][...]                            # bf16 [n*IN, OUTp]

        in_f = h.shape[1]
        width = n_knots * in_f

        # Lane-packed distances d[:, j*IN + i] = x_i - t[j]   (x replicated per
        # knot slab, knot value folded into each replica).
        d = jnp.concatenate(
            [h - (t0 + j * h_step) for j in range(n_knots)], axis=-1)

        # Degree-0 bases: indicator(t[j] <= x < t[j+1]) = ge_j - ge_{j+1}
        # (one compare + one roll + one sub on the full-width slab).
        # The last slab becomes finite garbage; it is annihilated later by the
        # zero-padded spline-weight rows.
        ge = (d >= 0.0).astype(jnp.float32)
        basis = ge - _roll_next(ge, in_f, width)

        # Cox-de Boor recursion: dense full-width VPU work, neighbours via XLU
        # roll.  Uniform grid => denominators are k*h and the right coefficient
        # is (k+1)/k - left coefficient.
        for k in range(1, spline_order + 1):
            nxt = _roll_next(basis, in_f, width)
            coef_l = d * (1.0 / (k * h_step))
            basis = coef_l * basis + ((k + 1.0) / k - coef_l) * nxt

        # Base (SiLU) branch + one deep spline contraction — native bf16 MXU
        # operands, f32 accumulation.
        silu_h = h * jax.nn.sigmoid(h)
        h = (jnp.dot(silu_h.astype(jnp.bfloat16), bw,
                     preferred_element_type=jnp.float32)
             + jnp.dot(basis.astype(jnp.bfloat16), sw,
                       preferred_element_type=jnp.float32))

    out_ref[...] = h.astype(out_ref.dtype)


# ----------------------------------------------------------------------------
# One-time weight preprocessing (scaler fold, transpose, reshape, padding,
# bf16 cast).  Hoisted out of the per-step forward.
# ----------------------------------------------------------------------------
def pack_kan_params(params, spline_order=5, weight_dtype=jnp.bfloat16):
    n_layers = len(params)
    operands = []
    meta = []
    out_features = None
    out_padded = None

    for li, p in enumerate(params):
        grid = np.asarray(jax.device_get(p["grid"]), dtype=np.float64)  # [IN, G]
        # Constant-knot fast path: requires the (initial) per-feature-uniform,
        # uniformly spaced grid.
        # TODO(synk): models that ran update_grid (adapted per-feature knots)
        # need a fallback path with per-feature grid operands.
        assert np.allclose(grid, grid[0:1]), "per-feature grids unsupported"
        knots = grid[0]
        n_knots = int(knots.shape[0])
        t0 = float(knots[0])
        h_step = float(knots[1] - knots[0])
        assert np.allclose(np.diff(knots), h_step, atol=1e-5), \
            "non-uniform grid unsupported"

        base_w = np.asarray(jax.device_get(p["base_w"]), np.float32)      # [OUT, IN]
        spline_w = np.asarray(jax.device_get(p["spline_w"]), np.float32)  # [OUT, IN, K]
        scaler = np.asarray(jax.device_get(p["spline_scaler"]), np.float32)
        out_f, in_f = base_w.shape
        K = spline_w.shape[2]
        assert K == n_knots - 1 - spline_order

        # Pad the final layer's OUT to a 128 multiple for lane-dense stores.
        last = (li == n_layers - 1)
        out_p = _round_up(out_f, 128) if last else out_f

        # Base weight: [IN, OUTp]
        bw = np.zeros((in_f, out_p), np.float32)
        bw[:, :out_f] = base_w.T

        # Spline weight: fold scaler, [OUT, IN, K] -> [K*IN, OUT], zero-pad to
        # [n_knots*IN, OUTp] so garbage basis slabs (index >= K) contribute 0.
        scaled = spline_w * scaler[:, :, None]
        sw = np.zeros((n_knots * in_f, out_p), np.float32)
        sw[:K * in_f, :out_f] = np.transpose(scaled, (2, 1, 0)).reshape(
            K * in_f, out_f)

        operands += [jnp.asarray(bw, weight_dtype),
                     jnp.asarray(sw, weight_dtype)]
        meta.append((t0, h_step, n_knots))
        out_features = out_f
        out_padded = out_p

    return tuple(operands), tuple(meta), out_features, out_padded


def _pick_batch_tile(batch):
    # One grid step unless each step still gets an MXU-filling tile (>=256
    # rows): avoids serial per-step overhead on 1-TC chips and M-underfilled
    # matmuls; gives the v7x megacore >=256 rows per core when it does split.
    if batch >= 512 and batch % 256 == 0:
        return 256
    return batch


@functools.partial(jax.jit,
                   static_argnames=("meta", "spline_order", "out_features",
                                    "out_padded", "tb"))
def _kan_forward_packed(x, operands, *, meta, spline_order, out_features,
                        out_padded, tb):
    batch, in0 = x.shape
    grid_steps = batch // tb

    in_specs = [pl.BlockSpec((tb, in0), lambda i: (i, 0))]
    for w in operands:
        # Full-array resident weight blocks (constant index_map).
        # TODO(synk): for production-scale layers (IN/OUT >= 512) tile OUT and
        # the n_knots*IN contraction axis with a VMEM f32 accumulator and
        # single-buffer the resident weights (pipeline_mode=pl.Buffered(1))
        # to fit v7x's 64 MiB VMEM; per-k spline accumulation bounds the live
        # basis footprint.
        in_specs.append(pl.BlockSpec(w.shape, lambda i: (0, 0)))

    kernel = functools.partial(kan_fused_kernel, layer_meta=meta,
                               spline_order=spline_order)

    out = pl.pallas_call(
        kernel,
        out_shape=jax.ShapeDtypeStruct((batch, out_padded), x.dtype),
        grid=(grid_steps,),
        in_specs=in_specs,
        out_specs=pl.BlockSpec((tb, out_padded), lambda i: (i, 0)),
        compiler_params=pltpu.CompilerParams(
            dimension_semantics=("parallel",),
            vmem_limit_bytes=64 * 1024 * 1024),
    )(x, *operands)
    return out[:, :out_features]


def kan_forward(x, params, spline_order=5, tb=None):
    """Convenience wrapper: packs weights (one-time cost) and runs the fused
    kernel.  For repeated calls, pack once with pack_kan_params and call
    _kan_forward_packed directly."""
    operands, meta, out_f, out_p = pack_kan_params(params, spline_order)
    if tb is None:
        tb = _pick_batch_tile(x.shape[0])
    assert x.shape[0] % tb == 0
    return _kan_forward_packed(x, operands, meta=meta,
                               spline_order=spline_order,
                               out_features=out_f, out_padded=out_p, tb=tb)


# ----------------------------------------------------------------------------
# Parameter construction (deterministic, synthetic — mirrors shapes in __init__)
# ----------------------------------------------------------------------------
def init_kan_params(key, layers_hidden, grid_size=5, spline_order=5,
                    grid_range=(-1.0, 1.0)):
    # TODO(synk): the torch init uses kaiming_uniform + curve2coeff (lstsq);
    # synthetic uniform init here — forward-pass math is what is being tested.
    h = (grid_range[1] - grid_range[0]) / grid_size
    knots = (jnp.arange(-spline_order, grid_size + spline_order + 1,
                        dtype=jnp.float32) * h + grid_range[0])
    params = []
    for in_f, out_f in zip(layers_hidden, layers_hidden[1:]):
        key, k1, k2, k3 = jax.random.split(key, 4)
        grid = jnp.broadcast_to(knots, (in_f, knots.shape[0]))
        base_w = jax.random.uniform(k1, (out_f, in_f), jnp.float32,
                                    -1.0, 1.0) / jnp.sqrt(in_f)
        spline_w = jax.random.uniform(k2, (out_f, in_f,
                                           grid_size + spline_order),
                                      jnp.float32, -0.1, 0.1)
        spline_scaler = jax.random.uniform(k3, (out_f, in_f), jnp.float32,
                                           -1.0, 1.0) / jnp.sqrt(in_f)
        params.append(dict(grid=grid, base_w=base_w, spline_w=spline_w,
                           spline_scaler=spline_scaler))
    return params


# ----------------------------------------------------------------------------
# Pure-JAX reference (mirrors the PyTorch math exactly) for verification
# ----------------------------------------------------------------------------
def kan_linear_ref(x, grid, base_w, spline_w, spline_scaler, spline_order):
    xe = x[:, :, None]
    bases = jnp.logical_and(xe >= grid[:, :-1], xe < grid[:, 1:]).astype(x.dtype)
    for k in range(1, spline_order + 1):
        bases = ((xe - grid[:, : -(k + 1)])
                 / (grid[:, k:-1] - grid[:, : -(k + 1)]) * bases[:, :, :-1]
                 + (grid[:, k + 1:] - xe)
                 / (grid[:, k + 1:] - grid[:, 1:-k]) * bases[:, :, 1:])
    base_out = jax.nn.silu(x) @ base_w.T
    scaled = spline_w * spline_scaler[:, :, None]
    spline_out = bases.reshape(x.shape[0], -1) @ scaled.reshape(
        base_w.shape[0], -1).T
    return base_out + spline_out


def kan_forward_ref(x, params, spline_order=5):
    # TODO(synk): update_grid / curve2coeff (torch.linalg.lstsq) are training-
    # time grid adaptation, not part of the inference forward -> not ported.
    for p in params:
        x = kan_linear_ref(x, p["grid"], p["base_w"], p["spline_w"],
                           p["spline_scaler"], spline_order)
    return x


# ----------------------------------------------------------------------------
if __name__ == "__main__":
    grid_size = 5
    spline_order = 5
    layers_hidden = [32, 64, 16]   # KAN([32, 64, 16])
    batch = 16

    key = jax.random.PRNGKey(0)
    key, kx = jax.random.split(key)
    x = jax.random.uniform(kx, (batch, layers_hidden[0]), jnp.float32,
                           -1.0, 1.0)

    params = init_kan_params(key, layers_hidden, grid_size=grid_size,
                             spline_order=spline_order)

    # One-time weight packing (hoisted out of the per-step forward path).
    operands, meta, out_f, out_p = pack_kan_params(params, spline_order)
    tb = _pick_batch_tile(batch)

    out = _kan_forward_packed(x, operands, meta=meta,
                              spline_order=spline_order,
                              out_features=out_f, out_padded=out_p, tb=tb)
    out = jax.block_until_ready(out)

    ref = jax.block_until_ready(kan_forward_ref(x, params,
                                                spline_order=spline_order))

    assert out.shape == (batch, layers_hidden[-1]), out.shape
    # bf16 MXU operands -> expect ~1e-2-level deviation vs the f32 reference.
    err = float(jnp.max(jnp.abs(out - ref)))
    assert jnp.allclose(out, ref, rtol=2e-2, atol=2e-2), err

    print("KERNEL_OK")
</pallas_src>

<mosaic_0001>
module attributes {stable_mosaic.version = 11 : i64} {
  func.func @kan_fused_kernel(%arg0: i32, %arg1: memref<16x32xf32, #tpu.memory_space<vmem>>, %arg2: memref<32x64xbf16, #tpu.memory_space<vmem>>, %arg3: memref<512x64xbf16, #tpu.memory_space<vmem>>, %arg4: memref<64x128xbf16, #tpu.memory_space<vmem>>, %arg5: memref<1024x128xbf16, #tpu.memory_space<vmem>>, %arg6: memref<16x128xf32, #tpu.memory_space<vmem>>) attributes {dimension_semantics = [#tpu.dimension_semantics<parallel>], iteration_bounds = array<i64: 1>, scalar_prefetch = 0 : i64, scratch_operands = 0 : i64, tpu.core_type = #tpu.core_type<tc>, window_params = [{transform_indices = @transform_0, window_bounds = array<i64: 16, 32>}, {pipeline_mode = #tpu.pipeline_mode<synchronous>, transform_indices = @transform_1, window_bounds = array<i64: 32, 64>}, {pipeline_mode = #tpu.pipeline_mode<synchronous>, transform_indices = @transform_2, window_bounds = array<i64: 512, 64>}, {pipeline_mode = #tpu.pipeline_mode<synchronous>, transform_indices = @transform_3, window_bounds = array<i64: 64, 128>}, {pipeline_mode = #tpu.pipeline_mode<synchronous>, transform_indices = @transform_4, window_bounds = array<i64: 1024, 128>}, {transform_indices = @transform_5, window_bounds = array<i64: 16, 128>}]} {
    %c0 = arith.constant 0 : index
    %c0_0 = arith.constant 0 : index
    %0 = vector.load %arg1[%c0, %c0_0] : memref<16x32xf32, #tpu.memory_space<vmem>>, vector<16x32xf32>
    %c0_1 = arith.constant 0 : index
    %c0_2 = arith.constant 0 : index
    %1 = vector.load %arg2[%c0_1, %c0_2] : memref<32x64xbf16, #tpu.memory_space<vmem>>, vector<32x64xbf16>
    %c0_3 = arith.constant 0 : index
    %c0_4 = arith.constant 0 : index
    %2 = vector.load %arg3[%c0_3, %c0_4] : memref<512x64xbf16, #tpu.memory_space<vmem>>, vector<512x64xbf16>
    %cst = arith.constant -3.000000e+00 : f32
    %3 = vector.broadcast %cst : f32 to vector<16x32xf32>
    %4 = arith.subf %0, %3 : vector<16x32xf32>
    %cst_5 = arith.constant -2.600000e+00 : f32
    %5 = vector.broadcast %cst_5 : f32 to vector<16x32xf32>
    %6 = arith.subf %0, %5 : vector<16x32xf32>
    %cst_6 = arith.constant -2.19999981 : f32
    %7 = vector.broadcast %cst_6 : f32 to vector<16x32xf32>
    %8 = arith.subf %0, %7 : vector<16x32xf32>
    %cst_7 = arith.constant -1.79999971 : f32
    %9 = vector.broadcast %cst_7 : f32 to vector<16x32xf32>
    %10 = arith.subf %0, %9 : vector<16x32xf32>
    %cst_8 = arith.constant -1.39999962 : f32
    %11 = vector.broadcast %cst_8 : f32 to vector<16x32xf32>
    %12 = arith.subf %0, %11 : vector<16x32xf32>
    %cst_9 = arith.constant -0.999999523 : f32
    %13 = vector.broadcast %cst_9 : f32 to vector<16x32xf32>
    %14 = arith.subf %0, %13 : vector<16x32xf32>
    %cst_10 = arith.constant -0.599999428 : f32
    %15 = vector.broadcast %cst_10 : f32 to vector<16x32xf32>
    %16 = arith.subf %0, %15 : vector<16x32xf32>
    %cst_11 = arith.constant -0.199999332 : f32
    %17 = vector.broadcast %cst_11 : f32 to vector<16x32xf32>
    %18 = arith.subf %0, %17 : vector<16x32xf32>
    %cst_12 = arith.constant 0.200000763 : f32
    %19 = vector.broadcast %cst_12 : f32 to vector<16x32xf32>
    %20 = arith.subf %0, %19 : vector<16x32xf32>
    %cst_13 = arith.constant 0.600000858 : f32
    %21 = vector.broadcast %cst_13 : f32 to vector<16x32xf32>
    %22 = arith.subf %0, %21 : vector<16x32xf32>
    %cst_14 = arith.constant 1.00000095 : f32
    %23 = vector.broadcast %cst_14 : f32 to vector<16x32xf32>
    %24 = arith.subf %0, %23 : vector<16x32xf32>
    %cst_15 = arith.constant 1.40000105 : f32
    %25 = vector.broadcast %cst_15 : f32 to vector<16x32xf32>
    %26 = arith.subf %0, %25 : vector<16x32xf32>
    %cst_16 = arith.constant 1.80000114 : f32
    %27 = vector.broadcast %cst_16 : f32 to vector<16x32xf32>
    %28 = arith.subf %0, %27 : vector<16x32xf32>
    %cst_17 = arith.constant 2.20000124 : f32
    %29 = vector.broadcast %cst_17 : f32 to vector<16x32xf32>
    %30 = arith.subf %0, %29 : vector<16x32xf32>
    %cst_18 = arith.constant 2.60000134 : f32
    %31 = vector.broadcast %cst_18 : f32 to vector<16x32xf32>
    %32 = arith.subf %0, %31 : vector<16x32xf32>
    %cst_19 = arith.constant 3.00000143 : f32
    %33 = vector.broadcast %cst_19 : f32 to vector<16x32xf32>
    %34 = arith.subf %0, %33 : vector<16x32xf32>
    %35 = tpu.concatenate %4, %6, %8, %10, %12, %14, %16, %18, %20, %22, %24, %26, %28, %30, %32, %34 in 1 : vector<16x32xf32>, vector<16x32xf32>, vector<16x32xf32>, vector<16x32xf32>, vector<16x32xf32>, vector<16x32xf32>, vector<16x32xf32>, vector<16x32xf32>, vector<16x32xf32>, vector<16x32xf32>, vector<16x32xf32>, vector<16x32xf32>, vector<16x32xf32>, vector<16x32xf32>, vector<16x32xf32>, vector<16x32xf32> -> vector<16x512xf32>
    %cst_20 = arith.constant 0.000000e+00 : f32
    %36 = vector.broadcast %cst_20 : f32 to vector<16x512xf32>
    %37 = arith.cmpf oge, %35, %36 : vector<16x512xf32>
    %38 = arith.extui %37 : vector<16x512xi1> to vector<16x512xi32>
    %39 = arith.sitofp %38 : vector<16x512xi32> to vector<16x512xf32>
    %c480_i32 = arith.constant 480 : i32
    %40 = tpu.dynamic_rotate %39 by %c480_i32 dim 1 : vector<16x512xf32>, i32 -> vector<16x512xf32>
    %41 = arith.subf %39, %40 : vector<16x512xf32>
    %c480_i32_21 = arith.constant 480 : i32
    %42 = tpu.dynamic_rotate %41 by %c480_i32_21 dim 1 : vector<16x512xf32>, i32 -> vector<16x512xf32>
    %cst_22 = arith.constant 2.49999952 : f32
    %43 = vector.broadcast %cst_22 : f32 to vector<16x512xf32>
    %44 = arith.mulf %35, %43 : vector<16x512xf32>
    %45 = arith.mulf %44, %41 : vector<16x512xf32>
    %cst_23 = arith.constant 2.000000e+00 : f32
    %46 = vector.broadcast %cst_23 : f32 to vector<16x512xf32>
    %47 = arith.subf %46, %44 : vector<16x512xf32>
    %48 = arith.mulf %47, %42 : vector<16x512xf32>
    %49 = arith.addf %45, %48 : vector<16x512xf32>
    %c480_i32_24 = arith.constant 480 : i32
    %50 = tpu.dynamic_rotate %49 by %c480_i32_24 dim 1 : vector<16x512xf32>, i32 -> vector<16x512xf32>
    %cst_25 = arith.constant 1.24999976 : f32
    %51 = vector.broadcast %cst_25 : f32 to vector<16x512xf32>
    %52 = arith.mulf %35, %51 : vector<16x512xf32>
    %53 = arith.mulf %52, %49 : vector<16x512xf32>
    %cst_26 = arith.constant 1.500000e+00 : f32
    %54 = vector.broadcast %cst_26 : f32 to vector<16x512xf32>
    %55 = arith.subf %54, %52 : vector<16x512xf32>
    %56 = arith.mulf %55, %50 : vector<16x512xf32>
    %57 = arith.addf %53, %56 : vector<16x512xf32>
    %c480_i32_27 = arith.constant 480 : i32
    %58 = tpu.dynamic_rotate %57 by %c480_i32_27 dim 1 : vector<16x512xf32>, i32 -> vector<16x512xf32>
    %cst_28 = arith.constant 0.833333134 : f32
    %59 = vector.broadcast %cst_28 : f32 to vector<16x512xf32>
    %60 = arith.mulf %35, %59 : vector<16x512xf32>
    %61 = arith.mulf %60, %57 : vector<16x512xf32>
    %cst_29 = arith.constant 1.33333337 : f32
    %62 = vector.broadcast %cst_29 : f32 to vector<16x512xf32>
    %63 = arith.subf %62, %60 : vector<16x512xf32>
    %64 = arith.mulf %63, %58 : vector<16x512xf32>
    %65 = arith.addf %61, %64 : vector<16x512xf32>
    %c480_i32_30 = arith.constant 480 : i32
    %66 = tpu.dynamic_rotate %65 by %c480_i32_30 dim 1 : vector<16x512xf32>, i32 -> vector<16x512xf32>
    %cst_31 = arith.constant 0.624999881 : f32
    %67 = vector.broadcast %cst_31 : f32 to vector<16x512xf32>
    %68 = arith.mulf %35, %67 : vector<16x512xf32>
    %69 = arith.mulf %68, %65 : vector<16x512xf32>
    %cst_32 = arith.constant 1.250000e+00 : f32
    %70 = vector.broadcast %cst_32 : f32 to vector<16x512xf32>
    %71 = arith.subf %70, %68 : vector<16x512xf32>
    %72 = arith.mulf %71, %66 : vector<16x512xf32>
    %73 = arith.addf %69, %72 : vector<16x512xf32>
    %c480_i32_33 = arith.constant 480 : i32
    %74 = tpu.dynamic_rotate %73 by %c480_i32_33 dim 1 : vector<16x512xf32>, i32 -> vector<16x512xf32>
    %cst_34 = arith.constant 0.499999881 : f32
    %75 = vector.broadcast %cst_34 : f32 to vector<16x512xf32>
    %76 = arith.mulf %35, %75 : vector<16x512xf32>
    %77 = arith.mulf %76, %73 : vector<16x512xf32>
    %cst_35 = arith.constant 1.200000e+00 : f32
    %78 = vector.broadcast %cst_35 : f32 to vector<16x512xf32>
    %79 = arith.subf %78, %76 : vector<16x512xf32>
    %80 = arith.mulf %79, %74 : vector<16x512xf32>
    %81 = arith.addf %77, %80 : vector<16x512xf32>
    %82 = arith.negf %0 : vector<16x32xf32>
    %83 = math.exp %82 : vector<16x32xf32>
    %cst_36 = arith.constant 1.000000e+00 : f32
    %84 = vector.broadcast %cst_36 : f32 to vector<16x32xf32>
    %85 = arith.addf %84, %83 : vector<16x32xf32>
    %86 = arith.divf %84, %85 : vector<16x32xf32>
    %87 = arith.mulf %0, %86 : vector<16x32xf32>
    %88 = arith.truncf %87 : vector<16x32xf32> to vector<16x32xbf16>
    %cst_37 = arith.constant dense<0.000000e+00> : vector<16x64xf32>
    %89 = tpu.matmul %88, %1, %cst_37 {dimension_numbers = #tpu.dot_dimension_numbers<[1], [0], [0], [1], [0, 0, 1, 1], [], []>} : vector<16x32xbf16>, vector<32x64xbf16>, vector<16x64xf32> -> vector<16x64xf32>
    %90 = arith.truncf %81 : vector<16x512xf32> to vector<16x512xbf16>
    %cst_38 = arith.constant dense<0.000000e+00> : vector<16x64xf32>
    %91 = tpu.matmul %90, %2, %cst_38 {dimension_numbers = #tpu.dot_dimension_numbers<[1], [0], [0], [1], [0, 0, 1, 1], [], []>} : vector<16x512xbf16>, vector<512x64xbf16>, vector<16x64xf32> -> vector<16x64xf32>
    %92 = arith.addf %89, %91 : vector<16x64xf32>
    %c0_39 = arith.constant 0 : index
    %c0_40 = arith.constant 0 : index
    %93 = vector.load %arg4[%c0_39, %c0_40] : memref<64x128xbf16, #tpu.memory_space<vmem>>, vector<64x128xbf16>
    %c0_41 = arith.constant 0 : index
    %c0_42 = arith.constant 0 : index
    %94 = vector.load %arg5[%c0_41, %c0_42] : memref<1024x128xbf16, #tpu.memory_space<vmem>>, vector<1024x128xbf16>
    %cst_43 = arith.constant -3.000000e+00 : f32
    %95 = vector.broadcast %cst_43 : f32 to vector<16x64xf32>
    %96 = arith.subf %92, %95 : vector<16x64xf32>
    %cst_44 = arith.constant -2.600000e+00 : f32
    %97 = vector.broadcast %cst_44 : f32 to vector<16x64xf32>
    %98 = arith.subf %92, %97 : vector<16x64xf32>
    %cst_45 = arith.constant -2.19999981 : f32
    %99 = vector.broadcast %cst_45 : f32 to vector<16x64xf32>
    %100 = arith.subf %92, %99 : vector<16x64xf32>
    %cst_46 = arith.constant -1.79999971 : f32
    %101 = vector.broadcast %cst_46 : f32 to vector<16x64xf32>
    %102 = arith.subf %92, %101 : vector<16x64xf32>
    %cst_47 = arith.constant -1.39999962 : f32
    %103 = vector.broadcast %cst_47 : f32 to vector<16x64xf32>
    %104 = arith.subf %92, %103 : vector<16x64xf32>
    %cst_48 = arith.constant -0.999999523 : f32
    %105 = vector.broadcast %cst_48 : f32 to vector<16x64xf32>
    %106 = arith.subf %92, %105 : vector<16x64xf32>
    %cst_49 = arith.constant -0.599999428 : f32
    %107 = vector.broadcast %cst_49 : f32 to vector<16x64xf32>
    %108 = arith.subf %92, %107 : vector<16x64xf32>
    %cst_50 = arith.constant -0.199999332 : f32
    %109 = vector.broadcast %cst_50 : f32 to vector<16x64xf32>
    %110 = arith.subf %92, %109 : vector<16x64xf32>
    %cst_51 = arith.constant 0.200000763 : f32
    %111 = vector.broadcast %cst_51 : f32 to vector<16x64xf32>
    %112 = arith.subf %92, %111 : vector<16x64xf32>
    %cst_52 = arith.constant 0.600000858 : f32
    %113 = vector.broadcast %cst_52 : f32 to vector<16x64xf32>
    %114 = arith.subf %92, %113 : vector<16x64xf32>
    %cst_53 = arith.constant 1.00000095 : f32
    %115 = vector.broadcast %cst_53 : f32 to vector<16x64xf32>
    %116 = arith.subf %92, %115 : vector<16x64xf32>
    %cst_54 = arith.constant 1.40000105 : f32
    %117 = vector.broadcast %cst_54 : f32 to vector<16x64xf32>
    %118 = arith.subf %92, %117 : vector<16x64xf32>
    %cst_55 = arith.constant 1.80000114 : f32
    %119 = vector.broadcast %cst_55 : f32 to vector<16x64xf32>
    %120 = arith.subf %92, %119 : vector<16x64xf32>
    %cst_56 = arith.constant 2.20000124 : f32
    %121 = vector.broadcast %cst_56 : f32 to vector<16x64xf32>
    %122 = arith.subf %92, %121 : vector<16x64xf32>
    %cst_57 = arith.constant 2.60000134 : f32
    %123 = vector.broadcast %cst_57 : f32 to vector<16x64xf32>
    %124 = arith.subf %92, %123 : vector<16x64xf32>
    %cst_58 = arith.constant 3.00000143 : f32
    %125 = vector.broadcast %cst_58 : f32 to vector<16x64xf32>
    %126 = arith.subf %92, %125 : vector<16x64xf32>
    %127 = tpu.concatenate %96, %98, %100, %102, %104, %106, %108, %110, %112, %114, %116, %118, %120, %122, %124, %126 in 1 : vector<16x64xf32>, vector<16x64xf32>, vector<16x64xf32>, vector<16x64xf32>, vector<16x64xf32>, vector<16x64xf32>, vector<16x64xf32>, vector<16x64xf32>, vector<16x64xf32>, vector<16x64xf32>, vector<16x64xf32>, vector<16x64xf32>, vector<16x64xf32>, vector<16x64xf32>, vector<16x64xf32>, vector<16x64xf32> -> vector<16x1024xf32>
    %cst_59 = arith.constant 0.000000e+00 : f32
    %128 = vector.broadcast %cst_59 : f32 to vector<16x1024xf32>
    %129 = arith.cmpf oge, %127, %128 : vector<16x1024xf32>
    %130 = arith.extui %129 : vector<16x1024xi1> to vector<16x1024xi32>
    %131 = arith.sitofp %130 : vector<16x1024xi32> to vector<16x1024xf32>
    %c960_i32 = arith.constant 960 : i32
    %132 = tpu.dynamic_rotate %131 by %c960_i32 dim 1 : vector<16x1024xf32>, i32 -> vector<16x1024xf32>
    %133 = arith.subf %131, %132 : vector<16x1024xf32>
    %c960_i32_60 = arith.constant 960 : i32
    %134 = tpu.dynamic_rotate %133 by %c960_i32_60 dim 1 : vector<16x1024xf32>, i32 -> vector<16x1024xf32>
    %cst_61 = arith.constant 2.49999952 : f32
    %135 = vector.broadcast %cst_61 : f32 to vector<16x1024xf32>
    %136 = arith.mulf %127, %135 : vector<16x1024xf32>
    %137 = arith.mulf %136, %133 : vector<16x1024xf32>
    %cst_62 = arith.constant 2.000000e+00 : f32
    %138 = vector.broadcast %cst_62 : f32 to vector<16x1024xf32>
    %139 = arith.subf %138, %136 : vector<16x1024xf32>
    %140 = arith.mulf %139, %134 : vector<16x1024xf32>
    %141 = arith.addf %137, %140 : vector<16x1024xf32>
    %c960_i32_63 = arith.constant 960 : i32
    %142 = tpu.dynamic_rotate %141 by %c960_i32_63 dim 1 : vector<16x1024xf32>, i32 -> vector<16x1024xf32>
    %cst_64 = arith.constant 1.24999976 : f32
    %143 = vector.broadcast %cst_64 : f32 to vector<16x1024xf32>
    %144 = arith.mulf %127, %143 : vector<16x1024xf32>
    %145 = arith.mulf %144, %141 : vector<16x1024xf32>
    %cst_65 = arith.constant 1.500000e+00 : f32
    %146 = vector.broadcast %cst_65 : f32 to vector<16x1024xf32>
    %147 = arith.subf %146, %144 : vector<16x1024xf32>
    %148 = arith.mulf %147, %142 : vector<16x1024xf32>
    %149 = arith.addf %145, %148 : vector<16x1024xf32>
    %c960_i32_66 = arith.constant 960 : i32
    %150 = tpu.dynamic_rotate %149 by %c960_i32_66 dim 1 : vector<16x1024xf32>, i32 -> vector<16x1024xf32>
    %cst_67 = arith.constant 0.833333134 : f32
    %151 = vector.broadcast %cst_67 : f32 to vector<16x1024xf32>
    %152 = arith.mulf %127, %151 : vector<16x1024xf32>
    %153 = arith.mulf %152, %149 : vector<16x1024xf32>
    %cst_68 = arith.constant 1.33333337 : f32
    %154 = vector.broadcast %cst_68 : f32 to vector<16x1024xf32>
    %155 = arith.subf %154, %152 : vector<16x1024xf32>
    %156 = arith.mulf %155, %150 : vector<16x1024xf32>
    %157 = arith.addf %153, %156 : vector<16x1024xf32>
    %c960_i32_69 = arith.constant 960 : i32
    %158 = tpu.dynamic_rotate %157 by %c960_i32_69 dim 1 : vector<16x1024xf32>, i32 -> vector<16x1024xf32>
    %cst_70 = arith.constant 0.624999881 : f32
    %159 = vector.broadcast %cst_70 : f32 to vector<16x1024xf32>
    %160 = arith.mulf %127, %159 : vector<16x1024xf32>
    %161 = arith.mulf %160, %157 : vector<16x1024xf32>
    %cst_71 = arith.constant 1.250000e+00 : f32
    %162 = vector.broadcast %cst_71 : f32 to vector<16x1024xf32>
    %163 = arith.subf %162, %160 : vector<16x1024xf32>
    %164 = arith.mulf %163, %158 : vector<16x1024xf32>
    %165 = arith.addf %161, %164 : vector<16x1024xf32>
    %c960_i32_72 = arith.constant 960 : i32
    %166 = tpu.dynamic_rotate %165 by %c960_i32_72 dim 1 : vector<16x1024xf32>, i32 -> vector<16x1024xf32>
    %cst_73 = arith.constant 0.499999881 : f32
    %167 = vector.broadcast %cst_73 : f32 to vector<16x1024xf32>
    %168 = arith.mulf %127, %167 : vector<16x1024xf32>
    %169 = arith.mulf %168, %165 : vector<16x1024xf32>
    %cst_74 = arith.constant 1.200000e+00 : f32
    %170 = vector.broadcast %cst_74 : f32 to vector<16x1024xf32>
    %171 = arith.subf %170, %168 : vector<16x1024xf32>
    %172 = arith.mulf %171, %166 : vector<16x1024xf32>
    %173 = arith.addf %169, %172 : vector<16x1024xf32>
    %174 = arith.negf %92 : vector<16x64xf32>
    %175 = math.exp %174 : vector<16x64xf32>
    %cst_75 = arith.constant 1.000000e+00 : f32
    %176 = vector.broadcast %cst_75 : f32 to vector<16x64xf32>
    %177 = arith.addf %176, %175 : vector<16x64xf32>
    %178 = arith.divf %176, %177 : vector<16x64xf32>
    %179 = arith.mulf %92, %178 : vector<16x64xf32>
    %180 = arith.truncf %179 : vector<16x64xf32> to vector<16x64xbf16>
    %cst_76 = arith.constant dense<0.000000e+00> : vector<16x128xf32>
    %181 = tpu.matmul %180, %93, %cst_76 {dimension_numbers = #tpu.dot_dimension_numbers<[1], [0], [0], [1], [0, 0, 1, 1], [], []>} : vector<16x64xbf16>, vector<64x128xbf16>, vector<16x128xf32> -> vector<16x128xf32>
    %182 = arith.truncf %173 : vector<16x1024xf32> to vector<16x1024xbf16>
    %cst_77 = arith.constant dense<0.000000e+00> : vector<16x128xf32>
    %183 = tpu.matmul %182, %94, %cst_77 {dimension_numbers = #tpu.dot_dimension_numbers<[1], [0], [0], [1], [0, 0, 1, 1], [], []>} : vector<16x1024xbf16>, vector<1024x128xbf16>, vector<16x128xf32> -> vector<16x128xf32>
    %184 = arith.addf %181, %183 : vector<16x128xf32>
    %c0_78 = arith.constant 0 : index
    %c0_79 = arith.constant 0 : index
    %185 = vector.load %arg6[%c0_78, %c0_79] : memref<16x128xf32, #tpu.memory_space<vmem>>, vector<16x128xf32>
    tpu.vector_store %arg6[%c0_78, %c0_79], %184 {strides = array<i32>} : memref<16x128xf32, #tpu.memory_space<vmem>>, vector<16x128xf32>,
    return
  }
  func.func @transform_0(%arg0: i32) -> (i32, i32) {
    %c0_i32 = arith.constant 0 : i32
    %c0_i32_0 = arith.constant 0 : i32
    return %arg0, %c0_i32 : i32, i32
  }
  func.func @transform_1(%arg0: i32) -> (i32, i32) {
    %c0_i32 = arith.constant 0 : i32
    %c0_i32_0 = arith.constant 0 : i32
    %c0_i32_1 = arith.constant 0 : i32
    return %c0_i32, %c0_i32_0 : i32, i32
  }
  func.func @transform_2(%arg0: i32) -> (i32, i32) {
    %c0_i32 = arith.constant 0 : i32
    %c0_i32_0 = arith.constant 0 : i32
    %c0_i32_1 = arith.constant 0 : i32
    return %c0_i32, %c0_i32_0 : i32, i32
  }
  func.func @transform_3(%arg0: i32) -> (i32, i32) {
    %c0_i32 = arith.constant 0 : i32
    %c0_i32_0 = arith.constant 0 : i32
    %c0_i32_1 = arith.constant 0 : i32
    return %c0_i32, %c0_i32_0 : i32, i32
  }
  func.func @transform_4(%arg0: i32) -> (i32, i32) {
    %c0_i32 = arith.constant 0 : i32
    %c0_i32_0 = arith.constant 0 : i32
    %c0_i32_1 = arith.constant 0 : i32
    return %c0_i32, %c0_i32_0 : i32, i32
  }
  func.func @transform_5(%arg0: i32) -> (i32, i32) {
    %c0_i32 = arith.constant 0 : i32
    %c0_i32_0 = arith.constant 0 : i32
    return %arg0, %c0_i32 : i32, i32
  }
}

</mosaic_0001>

<llo_original>
// kernel: _kan_forward_packed.1
$region0: #{_kan_forward_packed.1}
  #allocation0 [shape = 'u32[]', space=smem, size = 0x4, offset = 0x4, fixed_abs, tag = 'smem constant byte address 0x4 - core index']
  #allocation1 [shape = 'u32[144,128]{1,0:T(1,128)}', space=vmem, size = 0x12000, scoped, tag = 'internal scratch']
  %s0 = inlined_call_operand.hbm [shape: f32[16,32], index: 0, kind: input, shape index: {}]
  %s1 = inlined_call_operand.hbm [shape: bf16[32,64], index: 1, kind: input, shape index: {}]
  %s2 = inlined_call_operand.hbm [shape: bf16[512,64], index: 2, kind: input, shape index: {}]
  %s3 = inlined_call_operand.hbm [shape: bf16[64,128], index: 3, kind: input, shape index: {}]
  %s4 = inlined_call_operand.hbm [shape: bf16[1024,128], index: 4, kind: input, shape index: {}]
  %s5 = inlined_call_operand.hbm [shape: f32[16,128], index: 5, kind: output, shape index: {}]
  %s6 = sld [smem:[#allocation0]]
  $region50: #{_kan_forward_packed.1} parent=0
    _
  %s8 = ssub.s32 1, %s6
  %s9 = scalar_select 0, %s8, %s6
  $region1: #{_kan_forward_packed.1} parent=0
    #allocation2 [shape = 'u8[8192]{0}', space=vmem, size = 0x2000, scoped, tag = 'input window, operand 0, single buffered']
    #allocation3 [shape = 's32[1]{0}', space=sflag, size = 0x4, scoped, tag = 'scoped memory for _kan_forward_packed.1']
    #allocation4 [shape = 's32[1]{0}', space=sflag, size = 0x4, scoped, tag = 'scoped memory for _kan_forward_packed.1']
    #allocation5 [shape = 'u8[8192]{0}', space=vmem, size = 0x2000, scoped, tag = 'input window, operand 1, single buffered']
    #allocation6 [shape = 's32[1]{0}', space=sflag, size = 0x4, scoped, tag = 'scoped memory for _kan_forward_packed.1']
    #allocation7 [shape = 'u8[131072]{0}', space=vmem, size = 0x20000, scoped, tag = 'input window, operand 2, single buffered']
    #allocation8 [shape = 'u8[16384]{0}', space=vmem, size = 0x4000, scoped, tag = 'input window, operand 3, single buffered']
    #allocation9 [shape = 's32[1]{0}', space=sflag, size = 0x4, scoped, tag = 'scoped memory for _kan_forward_packed.1']
    #allocation10 [shape = 'u8[262144]{0}', space=vmem, size = 0x40000, scoped, tag = 'input window, operand 4, single buffered']
    #allocation11 [shape = 'u8[8192]{0}', space=vmem, size = 0x2000, scoped, tag = 'output window, operand 0, single buffered']
    %10 = vsyncpa [#allocation3], 0
    %11 = vsyncpa [#allocation6], 0
    %12 = vsyncpa [#allocation9], 0
    %13 = vsyncpa [#allocation4], 0
    // Predicated region
    $region2: #{_kan_forward_packed.1} parent=1 // pred_check
      _
    $region3: #{_kan_forward_packed.1} parent=1 // pred_check_branch
      %15 = sbr.rel (0) target = $region5
    $region4: #{_kan_forward_packed.1} parent=1 // pred_region
      %s17 = ssub.s32 256, 256
      %18 = vsyncadd [#allocation3], %s17
      %s19 = sshll.u32 [#allocation2], 4
      %s20 = int_to_ptr.vmem [resolvable:$true] %s19
      %25 = dma.hbm_to_vmem [thread:$0]  %s0, 256, %s20, [#allocation3], 128, 128, 8
    $region5: #{_kan_forward_packed.1} parent=1 // pred_fallthru
      _
    // Predicated region
    $region6: #{_kan_forward_packed.1} parent=1 // pred_check
      _
    $region7: #{_kan_forward_packed.1} parent=1 // pred_check_branch
      %27 = sbr.rel (0) target = $region9
    $region8: #{_kan_forward_packed.1} parent=1 // pred_region
      %s29 = ssub.s32 256, 256
      %30 = vsyncadd [#allocation6], %s29
      %s31 = sshll.u32 [#allocation5], 4
      %s32 = int_to_ptr.vmem [resolvable:$true] %s31
      %37 = dma.hbm_to_vmem [thread:$0]  %s1, 256, %s32, [#allocation6], 64, 64, 4
    $region9: #{_kan_forward_packed.1} parent=1 // pred_fallthru
      _
    // Predicated region
    $region10: #{_kan_forward_packed.1} parent=1 // pred_check
      _
    $region11: #{_kan_forward_packed.1} parent=1 // pred_check_branch
      %39 = sbr.rel (0) target = $region13
    $region12: #{_kan_forward_packed.1} parent=1 // pred_region
      %s41 = ssub.s32 4096, 4096
      %42 = vsyncadd [#allocation6], %s41
      %s43 = sshll.u32 [#allocation7], 4
      %s44 = int_to_ptr.vmem [resolvable:$true] %s43
      %49 = dma.hbm_to_vmem [thread:$0]  %s2, 4096, %s44, [#allocation6], 64, 64, 4
    $region13: #{_kan_forward_packed.1} parent=1 // pred_fallthru
      _
    // Predicated region
    $region14: #{_kan_forward_packed.1} parent=1 // pred_check
      _
    $region15: #{_kan_forward_packed.1} parent=1 // pred_check_branch
      %51 = sbr.rel (0) target = $region17
    $region16: #{_kan_forward_packed.1} parent=1 // pred_region
      %s53 = ssub.s32 512, 512
      %54 = vsyncadd [#allocation9], %s53
      %s55 = sshll.u32 [#allocation8], 4
      %s56 = int_to_ptr.vmem [resolvable:$true] %s55
      %61 = dma.hbm_to_vmem [thread:$0]  %s3, 512, %s56, [#allocation9], 64, 64, 4
    $region17: #{_kan_forward_packed.1} parent=1 // pred_fallthru
      _
    // Predicated region
    $region18: #{_kan_forward_packed.1} parent=1 // pred_check
      _
    $region19: #{_kan_forward_packed.1} parent=1 // pred_check_branch
      %63 = sbr.rel (0) target = $region21
    $region20: #{_kan_forward_packed.1} parent=1 // pred_region
      %s65 = ssub.s32 8192, 8192
      %66 = vsyncadd [#allocation9], %s65
      %s67 = sshll.u32 [#allocation10], 4
      %s68 = int_to_ptr.vmem [resolvable:$true] %s67
      %73 = dma.hbm_to_vmem [thread:$0]  %s4, 8192, %s68, [#allocation9], 64, 64, 4
    $region21: #{_kan_forward_packed.1} parent=1 // pred_fallthru
      _
    // Predicated region
    $region22: #{_kan_forward_packed.1} parent=1 // pred_check
      _
    $region23: #{_kan_forward_packed.1} parent=1 // pred_check_branch
      %75 = sbr.rel (0) target = $region25
    $region24: #{_kan_forward_packed.1} parent=1 // pred_region
      %76 = dma.done [#allocation3], 256
    $region25: #{_kan_forward_packed.1} parent=1 // pred_fallthru
      _
    // Predicated region
    $region26: #{_kan_forward_packed.1} parent=1 // pred_check
      _
    $region27: #{_kan_forward_packed.1} parent=1 // pred_check_branch
      %78 = sbr.rel (0) target = $region29
    $region28: #{_kan_forward_packed.1} parent=1 // pred_region
      %79 = dma.done [#allocation6], 256
    $region29: #{_kan_forward_packed.1} parent=1 // pred_fallthru
      _
    // Predicated region
    $region30: #{_kan_forward_packed.1} parent=1 // pred_check
      _
    $region31: #{_kan_forward_packed.1} parent=1 // pred_check_branch
      %81 = sbr.rel (0) target = $region33
    $region32: #{_kan_forward_packed.1} parent=1 // pred_region
      %82 = dma.done [#allocation6], 4096
    $region33: #{_kan_forward_packed.1} parent=1 // pred_fallthru
      _
    // Predicated region
    $region34: #{_kan_forward_packed.1} parent=1 // pred_check
      _
    $region35: #{_kan_forward_packed.1} parent=1 // pred_check_branch
      %84 = sbr.rel (0) target = $region37
    $region36: #{_kan_forward_packed.1} parent=1 // pred_region
      %85 = dma.done [#allocation9], 512
    $region37: #{_kan_forward_packed.1} parent=1 // pred_fallthru
      _
    // Predicated region
    $region38: #{_kan_forward_packed.1} parent=1 // pred_check
      _
    $region39: #{_kan_forward_packed.1} parent=1 // pred_check_branch
      %87 = sbr.rel (0) target = $region41
    $region40: #{_kan_forward_packed.1} parent=1 // pred_region
      %88 = dma.done [#allocation9], 8192
    $region41: #{_kan_forward_packed.1} parent=1 // pred_fallthru
      _
    %v90 = vld [vmem:[#allocation2] sm:$0xff]
    %v91 = vld [vmem:[#allocation2 + $0x8] sm:$0xff]
    %v92 = vld [vmem:[#allocation5] sm:$0xf]
    %v93 = vld [vmem:[#allocation5 + $0x4] sm:$0xf]
    %v94 = vld [vmem:[#allocation5 + $0x8] sm:$0xf]
    %v95 = vld [vmem:[#allocation5 + $0xc] sm:$0xf]
    %v96 = vld [vmem:[#allocation7] sm:$0xf]
    %v97 = vld [vmem:[#allocation7 + $0x4] sm:$0xf]
    %v98 = vld [vmem:[#allocation7 + $0x8] sm:$0xf]
    %v99 = vld [vmem:[#allocation7 + $0xc] sm:$0xf]
    %v100 = vld [vmem:[#allocation7 + $0x10] sm:$0xf]
    %v101 = vld [vmem:[#allocation7 + $0x14] sm:$0xf]
    %v102 = vld [vmem:[#allocation7 + $0x18] sm:$0xf]
    %v103 = vld [vmem:[#allocation7 + $0x1c] sm:$0xf]
    %v104 = vld [vmem:[#allocation7 + $0x20] sm:$0xf]
    %v105 = vld [vmem:[#allocation7 + $0x24] sm:$0xf]
    %v106 = vld [vmem:[#allocation7 + $0x28] sm:$0xf]
    %v107 = vld [vmem:[#allocation7 + $0x2c] sm:$0xf]
    %v108 = vld [vmem:[#allocation7 + $0x30] sm:$0xf]
    %v109 = vld [vmem:[#allocation7 + $0x34] sm:$0xf]
    %v110 = vld [vmem:[#allocation7 + $0x38] sm:$0xf]
    %v111 = vld [vmem:[#allocation7 + $0x3c] sm:$0xf]
    %v112 = vld [vmem:[#allocation7 + $0x40] sm:$0xf]
    %v113 = vld [vmem:[#allocation7 + $0x44] sm:$0xf]
    %v114 = vld [vmem:[#allocation7 + $0x48] sm:$0xf]
    %v115 = vld [vmem:[#allocation7 + $0x4c] sm:$0xf]
    %v116 = vld [vmem:[#allocation7 + $0x50] sm:$0xf]
    %v117 = vld [vmem:[#allocation7 + $0x54] sm:$0xf]
    %v118 = vld [vmem:[#allocation7 + $0x58] sm:$0xf]
    %v119 = vld [vmem:[#allocation7 + $0x5c] sm:$0xf]
    %v120 = vld [vmem:[#allocation7 + $0x60] sm:$0xf]
    %v121 = vld [vmem:[#allocation7 + $0x64] sm:$0xf]
    %v122 = vld [vmem:[#allocation7 + $0x68] sm:$0xf]
    %v123 = vld [vmem:[#allocation7 + $0x6c] sm:$0xf]
    %v124 = vld [vmem:[#allocation7 + $0x70] sm:$0xf]
    %v125 = vld [vmem:[#allocation7 + $0x74] sm:$0xf]
    %v126 = vld [vmem:[#allocation7 + $0x78] sm:$0xf]
    %v127 = vld [vmem:[#allocation7 + $0x7c] sm:$0xf]
    %v128 = vld [vmem:[#allocation7 + $0x80] sm:$0xf]
    %v129 = vld [vmem:[#allocation7 + $0x84] sm:$0xf]
    %v130 = vld [vmem:[#allocation7 + $0x88] sm:$0xf]
    %v131 = vld [vmem:[#allocation7 + $0x8c] sm:$0xf]
    %v132 = vld [vmem:[#allocation7 + $0x90] sm:$0xf]
    %v133 = vld [vmem:[#allocation7 + $0x94] sm:$0xf]
    %v134 = vld [vmem:[#allocation7 + $0x98] sm:$0xf]
    %v135 = vld [vmem:[#allocation7 + $0x9c] sm:$0xf]
    %v136 = vld [vmem:[#allocation7 + $0xa0] sm:$0xf]
    %v137 = vld [vmem:[#allocation7 + $0xa4] sm:$0xf]
    %v138 = vld [vmem:[#allocation7 + $0xa8] sm:$0xf]
    %v139 = vld [vmem:[#allocation7 + $0xac] sm:$0xf]
    %v140 = vld [vmem:[#allocation7 + $0xb0] sm:$0xf]
    %v141 = vld [vmem:[#allocation7 + $0xb4] sm:$0xf]
    %v142 = vld [vmem:[#allocation7 + $0xb8] sm:$0xf]
    %v143 = vld [vmem:[#allocation7 + $0xbc] sm:$0xf]
    %v144 = vld [vmem:[#allocation7 + $0xc0] sm:$0xf]
    %v145 = vld [vmem:[#allocation7 + $0xc4] sm:$0xf]
    %v146 = vld [vmem:[#allocation7 + $0xc8] sm:$0xf]
    %v147 = vld [vmem:[#allocation7 + $0xcc] sm:$0xf]
    %v148 = vld [vmem:[#allocation7 + $0xd0] sm:$0xf]
    %v149 = vld [vmem:[#allocation7 + $0xd4] sm:$0xf]
    %v150 = vld [vmem:[#allocation7 + $0xd8] sm:$0xf]
    %v151 = vld [vmem:[#allocation7 + $0xdc] sm:$0xf]
    %v152 = vld [vmem:[#allocation7 + $0xe0] sm:$0xf]
    %v153 = vld [vmem:[#allocation7 + $0xe4] sm:$0xf]
    %v154 = vld [vmem:[#allocation7 + $0xe8] sm:$0xf]
    %v155 = vld [vmem:[#allocation7 + $0xec] sm:$0xf]
    %v156 = vld [vmem:[#allocation7 + $0xf0] sm:$0xf]
    %v157 = vld [vmem:[#allocation7 + $0xf4] sm:$0xf]
    %v158 = vld [vmem:[#allocation7 + $0xf8] sm:$0xf]
    %v159 = vld [vmem:[#allocation7 + $0xfc] sm:$0xf]
    %v160 = vsub.f32 %v90, -3.0
    %v161 = vsub.f32 %v91, -3.0
    %v162 = vsub.f32 %v90, -2.6
    %v163 = vsub.f32 %v91, -2.6
    %v164 = vsub.f32 %v90, -2.1999998
    %v165 = vsub.f32 %v91, -2.1999998
    %v166 = vsub.f32 %v90, -1.7999997
    %v167 = vsub.f32 %v91, -1.7999997
    %v168 = vsub.f32 %v90, -1.3999996
    %v169 = vsub.f32 %v91, -1.3999996
    %v170 = vsub.f32 %v90, -0.9999995
    %v171 = vsub.f32 %v91, -0.9999995
    %v172 = vsub.f32 %v90, -0.5999994
    %v173 = vsub.f32 %v91, -0.5999994
    %v174 = vsub.f32 %v90, -0.19999933
    %v175 = vsub.f32 %v91, -0.19999933
    %v176 = vsub.f32 %v90, 0.20000076
    %v177 = vsub.f32 %v91, 0.20000076
    %v178 = vsub.f32 %v90, 0.60000086
    %v179 = vsub.f32 %v91, 0.60000086
    %v180 = vsub.f32 %v90, 1.000001
    %v181 = vsub.f32 %v91, 1.000001
    %v182 = vsub.f32 %v90, 1.400001
    %v183 = vsub.f32 %v91, 1.400001
    %v184 = vsub.f32 %v90, 1.8000011
    %v185 = vsub.f32 %v91, 1.8000011
    %v186 = vsub.f32 %v90, 2.2000012
    %v187 = vsub.f32 %v91, 2.2000012
    %v188 = vsub.f32 %v90, 2.6000013
    %v189 = vsub.f32 %v91, 2.6000013
    %v190 = vsub.f32 %v90, 3.0000014
    %v191 = vsub.f32 %v91, 3.0000014
    %194 = vrot.lane.b32.xlu0 %v162, 32
    %v195 = vpop.permute.xlu0 %194
    %196 = vrot.lane.b32.xlu0 %v163, 32
    %v197 = vpop.permute.xlu0 %196
    %202 = vrot.lane.b32.xlu0 %v164, 64
    %v203 = vpop.permute.xlu0 %202
    %204 = vrot.lane.b32.xlu0 %v165, 64
    %v205 = vpop.permute.xlu0 %204
    %210 = vrot.lane.b32.xlu0 %v166, 96
    %v211 = vpop.permute.xlu0 %210
    %212 = vrot.lane.b32.xlu0 %v167, 96
    %v213 = vpop.permute.xlu0 %212
    %218 = vrot.lane.b32.xlu0 %v170, 32
    %v219 = vpop.permute.xlu0 %218
    %220 = vrot.lane.b32.xlu0 %v171, 32
    %v221 = vpop.permute.xlu0 %220
    %226 = vrot.lane.b32.xlu0 %v172, 64
    %v227 = vpop.permute.xlu0 %226
    %228 = vrot.lane.b32.xlu0 %v173, 64
    %v229 = vpop.permute.xlu0 %228
    %234 = vrot.lane.b32.xlu0 %v174, 96
    %v235 = vpop.permute.xlu0 %234
    %236 = vrot.lane.b32.xlu0 %v175, 96
    %v237 = vpop.permute.xlu0 %236
    %242 = vrot.lane.b32.xlu0 %v178, 32
    %v243 = vpop.permute.xlu0 %242
    %244 = vrot.lane.b32.xlu0 %v179, 32
    %v245 = vpop.permute.xlu0 %244
    %250 = vrot.lane.b32.xlu0 %v180, 64
    %v251 = vpop.permute.xlu0 %250
    %252 = vrot.lane.b32.xlu0 %v181, 64
    %v253 = vpop.permute.xlu0 %252
    %258 = vrot.lane.b32.xlu0 %v182, 96
    %v259 = vpop.permute.xlu0 %258
    %260 = vrot.lane.b32.xlu0 %v183, 96
    %v261 = vpop.permute.xlu0 %260
    %266 = vrot.lane.b32.xlu0 %v186, 32
    %v267 = vpop.permute.xlu0 %266
    %268 = vrot.lane.b32.xlu0 %v187, 32
    %v269 = vpop.permute.xlu0 %268
    %274 = vrot.lane.b32.xlu0 %v188, 64
    %v275 = vpop.permute.xlu0 %274
    %276 = vrot.lane.b32.xlu0 %v189, 64
    %v277 = vpop.permute.xlu0 %276
    %282 = vrot.lane.b32.xlu0 %v190, 96
    %v283 = vpop.permute.xlu0 %282
    %284 = vrot.lane.b32.xlu0 %v191, 96
    %v285 = vpop.permute.xlu0 %284
    %vm288 = vcmask 261120
    %v289 = vsel %vm288, %v160, %v195
    %v290 = vsel %vm288, %v161, %v197
    %vm291 = vcmask 523264
    %v292 = vsel %vm291, %v289, %v203
    %v293 = vsel %vm291, %v290, %v205
    %vm294 = vcmask 785408
    %v295 = vsel %vm294, %v292, %v211
    %v296 = vsel %vm294, %v293, %v213
    %v297 = vsel %vm288, %v168, %v219
    %v298 = vsel %vm288, %v169, %v221
    %v299 = vsel %vm291, %v297, %v227
    %v300 = vsel %vm291, %v298, %v229
    %v301 = vsel %vm294, %v299, %v235
    %v302 = vsel %vm294, %v300, %v237
    %v303 = vsel %vm288, %v176, %v243
    %v304 = vsel %vm288, %v177, %v245
    %v305 = vsel %vm291, %v303, %v251
    %v306 = vsel %vm291, %v304, %v253
    %v307 = vsel %vm294, %v305, %v259
    %v308 = vsel %vm294, %v306, %v261
    %v309 = vsel %vm288, %v184, %v267
    %v310 = vsel %vm288, %v185, %v269
    %v311 = vsel %vm291, %v309, %v275
    %v312 = vsel %vm291, %v310, %v277
    %v313 = vsel %vm294, %v311, %v283
    %v314 = vsel %vm294, %v312, %v285
    %vm315 = vcmp.ge.f32.partialorder %v295, 0.0
    %vm316 = vcmp.ge.f32.partialorder %v301, 0.0
    %vm317 = vcmp.ge.f32.partialorder %v307, 0.0
    %vm318 = vcmp.ge.f32.partialorder %v313, 0.0
    %vm319 = vcmp.ge.f32.partialorder %v296, 0.0
    %vm320 = vcmp.ge.f32.partialorder %v302, 0.0
    %vm321 = vcmp.ge.f32.partialorder %v308, 0.0
    %vm322 = vcmp.ge.f32.partialorder %v314, 0.0
    %v323 = vsel %vm315, 1, 0
    %v324 = vsel %vm316, 1, 0
    %v325 = vsel %vm317, 1, 0
    %v326 = vsel %vm318, 1, 0
    %v327 = vsel %vm319, 1, 0
    %v328 = vsel %vm320, 1, 0
    %v329 = vsel %vm321, 1, 0
    %v330 = vsel %vm322, 1, 0
    %v331 = vcvt.s32.f32 %v323
    %v332 = vcvt.s32.f32 %v324
    %v333 = vcvt.s32.f32 %v325
    %v334 = vcvt.s32.f32 %v326
    %v335 = vcvt.s32.f32 %v327
    %v336 = vcvt.s32.f32 %v328
    %v337 = vcvt.s32.f32 %v329
    %v338 = vcvt.s32.f32 %v330
    %339 = vrot.lane.b32.xlu0 %v331, 96
    %v340 = vpop.permute.xlu0 %339
    %341 = vrot.lane.b32.xlu0 %v335, 96
    %v342 = vpop.permute.xlu0 %341
    %343 = vrot.lane.b32.xlu0 %v332, 96
    %v344 = vpop.permute.xlu0 %343
    %345 = vrot.lane.b32.xlu0 %v336, 96
    %v346 = vpop.permute.xlu0 %345
    %347 = vrot.lane.b32.xlu0 %v333, 96
    %v348 = vpop.permute.xlu0 %347
    %349 = vrot.lane.b32.xlu0 %v337, 96
    %v350 = vpop.permute.xlu0 %349
    %351 = vrot.lane.b32.xlu0 %v334, 96
    %v352 = vpop.permute.xlu0 %351
    %353 = vrot.lane.b32.xlu0 %v338, 96
    %v354 = vpop.permute.xlu0 %353
    %v355 = vlaneseq
    %v356 = vand.u32 %v355, 127
    %vm357 = vcmp.lt.s32.totalorder %v356, 96
    %v358 = vsel %vm357, %v348, %v352
    %v359 = vsel %vm357, %v350, %v354
    %v360 = vsel %vm357, %v344, %v348
    %v361 = vsel %vm357, %v346, %v350
    %v362 = vsel %vm357, %v340, %v344
    %v363 = vsel %vm357, %v342, %v346
    %v364 = vsel %vm357, %v352, %v340
    %v365 = vsel %vm357, %v354, %v342
    %v366 = vsub.f32 %v331, %v362
    %v367 = vsub.f32 %v332, %v360
    %v368 = vsub.f32 %v333, %v358
    %v369 = vsub.f32 %v334, %v364
    %v370 = vsub.f32 %v335, %v363
    %v371 = vsub.f32 %v336, %v361
    %v372 = vsub.f32 %v337, %v359
    %v373 = vsub.f32 %v338, %v365
    %374 = vrot.lane.b32.xlu0 %v366, 96
    %v375 = vpop.permute.xlu0 %374
    %376 = vrot.lane.b32.xlu0 %v370, 96
    %v377 = vpop.permute.xlu0 %376
    %378 = vrot.lane.b32.xlu0 %v367, 96
    %v379 = vpop.permute.xlu0 %378
    %380 = vrot.lane.b32.xlu0 %v371, 96
    %v381 = vpop.permute.xlu0 %380
    %382 = vrot.lane.b32.xlu0 %v368, 96
    %v383 = vpop.permute.xlu0 %382
    %384 = vrot.lane.b32.xlu0 %v372, 96
    %v385 = vpop.permute.xlu0 %384
    %386 = vrot.lane.b32.xlu0 %v369, 96
    %v387 = vpop.permute.xlu0 %386
    %388 = vrot.lane.b32.xlu0 %v373, 96
    %v389 = vpop.permute.xlu0 %388
    %v390 = vsel %vm357, %v383, %v387
    %v391 = vsel %vm357, %v385, %v389
    %v392 = vsel %vm357, %v379, %v383
    %v393 = vsel %vm357, %v381, %v385
    %v394 = vsel %vm357, %v375, %v379
    %v395 = vsel %vm357, %v377, %v381
    %v396 = vsel %vm357, %v387, %v375
    %v397 = vsel %vm357, %v389, %v377
    %v398 = vmul.f32 %v295, 2.4999995
    %v399 = vmul.f32 %v301, 2.4999995
    %v400 = vmul.f32 %v307, 2.4999995
    %v401 = vmul.f32 %v313, 2.4999995
    %v402 = vmul.f32 %v296, 2.4999995
    %v403 = vmul.f32 %v302, 2.4999995
    %v404 = vmul.f32 %v308, 2.4999995
    %v405 = vmul.f32 %v314, 2.4999995
    %v406 = vmul.f32 %v398, %v366
    %v407 = vmul.f32 %v399, %v367
    %v408 = vmul.f32 %v400, %v368
    %v409 = vmul.f32 %v401, %v369
    %v410 = vmul.f32 %v402, %v370
    %v411 = vmul.f32 %v403, %v371
    %v412 = vmul.f32 %v404, %v372
    %v413 = vmul.f32 %v405, %v373
    %v414 = vsub.f32 2.0, %v398
    %v415 = vsub.f32 2.0, %v399
    %v416 = vsub.f32 2.0, %v400
    %v417 = vsub.f32 2.0, %v401
    %v418 = vsub.f32 2.0, %v402
    %v419 = vsub.f32 2.0, %v403
    %v420 = vsub.f32 2.0, %v404
    %v421 = vsub.f32 2.0, %v405
    %v422 = vmul.f32 %v414, %v394
    %v423 = vmul.f32 %v415, %v392
    %v424 = vmul.f32 %v416, %v390
    %v425 = vmul.f32 %v417, %v396
    %v426 = vmul.f32 %v418, %v395
    %v427 = vmul.f32 %v419, %v393
    %v428 = vmul.f32 %v420, %v391
    %v429 = vmul.f32 %v421, %v397
    %v430 = vadd.f32 %v406, %v422
    %v431 = vadd.f32 %v407, %v423
    %v432 = vadd.f32 %v408, %v424
    %v433 = vadd.f32 %v409, %v425
    %v434 = vadd.f32 %v410, %v426
    %v435 = vadd.f32 %v411, %v427
    %v436 = vadd.f32 %v412, %v428
    %v437 = vadd.f32 %v413, %v429
    %438 = vrot.lane.b32.xlu0 %v430, 96
    %v439 = vpop.permute.xlu0 %438
    %440 = vrot.lane.b32.xlu0 %v434, 96
    %v441 = vpop.permute.xlu0 %440
    %442 = vrot.lane.b32.xlu0 %v431, 96
    %v443 = vpop.permute.xlu0 %442
    %444 = vrot.lane.b32.xlu0 %v435, 96
    %v445 = vpop.permute.xlu0 %444
    %446 = vrot.lane.b32.xlu0 %v432, 96
    %v447 = vpop.permute.xlu0 %446
    %448 = vrot.lane.b32.xlu0 %v436, 96
    %v449 = vpop.permute.xlu0 %448
    %450 = vrot.lane.b32.xlu0 %v433, 96
    %v451 = vpop.permute.xlu0 %450
    %452 = vrot.lane.b32.xlu0 %v437, 96
    %v453 = vpop.permute.xlu0 %452
    %v454 = vsel %vm357, %v447, %v451
    %v455 = vsel %vm357, %v449, %v453
    %v456 = vsel %vm357, %v443, %v447
    %v457 = vsel %vm357, %v445, %v449
    %v458 = vsel %vm357, %v439, %v443
    %v459 = vsel %vm357, %v441, %v445
    %v460 = vsel %vm357, %v451, %v439
    %v461 = vsel %vm357, %v453, %v441
    %v462 = vmul.f32 %v295, 1.2499998
    %v463 = vmul.f32 %v301, 1.2499998
    %v464 = vmul.f32 %v307, 1.2499998
    %v465 = vmul.f32 %v313, 1.2499998
    %v466 = vmul.f32 %v296, 1.2499998
    %v467 = vmul.f32 %v302, 1.2499998
    %v468 = vmul.f32 %v308, 1.2499998
    %v469 = vmul.f32 %v314, 1.2499998
    %v470 = vmul.f32 %v462, %v430
    %v471 = vmul.f32 %v463, %v431
    %v472 = vmul.f32 %v464, %v432
    %v473 = vmul.f32 %v465, %v433
    %v474 = vmul.f32 %v466, %v434
    %v475 = vmul.f32 %v467, %v435
    %v476 = vmul.f32 %v468, %v436
    %v477 = vmul.f32 %v469, %v437
    %v478 = vsub.f32 1.5, %v462
    %v479 = vsub.f32 1.5, %v463
    %v480 = vsub.f32 1.5, %v464
    %v481 = vsub.f32 1.5, %v465
    %v482 = vsub.f32 1.5, %v466
    %v483 = vsub.f32 1.5, %v467
    %v484 = vsub.f32 1.5, %v468
    %v485 = vsub.f32 1.5, %v469
    %v486 = vmul.f32 %v478, %v458
    %v487 = vmul.f32 %v479, %v456
    %v488 = vmul.f32 %v480, %v454
    %v489 = vmul.f32 %v481, %v460
    %v490 = vmul.f32 %v482, %v459
    %v491 = vmul.f32 %v483, %v457
    %v492 = vmul.f32 %v484, %v455
    %v493 = vmul.f32 %v485, %v461
    %v494 = vadd.f32 %v470, %v486
    %v495 = vadd.f32 %v471, %v487
    %v496 = vadd.f32 %v472, %v488
    %v497 = vadd.f32 %v473, %v489
    %v498 = vadd.f32 %v474, %v490
    %v499 = vadd.f32 %v475, %v491
    %v500 = vadd.f32 %v476, %v492
    %v501 = vadd.f32 %v477, %v493
    %502 = vrot.lane.b32.xlu0 %v494, 96
    %v503 = vpop.permute.xlu0 %502
    %504 = vrot.lane.b32.xlu0 %v498, 96
    %v505 = vpop.permute.xlu0 %504
    %506 = vrot.lane.b32.xlu0 %v495, 96
    %v507 = vpop.permute.xlu0 %506
    %508 = vrot.lane.b32.xlu0 %v499, 96
    %v509 = vpop.permute.xlu0 %508
    %510 = vrot.lane.b32.xlu0 %v496, 96
    %v511 = vpop.permute.xlu0 %510
    %512 = vrot.lane.b32.xlu0 %v500, 96
    %v513 = vpop.permute.xlu0 %512
    %514 = vrot.lane.b32.xlu0 %v497, 96
    %v515 = vpop.permute.xlu0 %514
    %516 = vrot.lane.b32.xlu0 %v501, 96
    %v517 = vpop.permute.xlu0 %516
    %v518 = vsel %vm357, %v511, %v515
    %v519 = vsel %vm357, %v513, %v517
    %v520 = vsel %vm357, %v507, %v511
    %v521 = vsel %vm357, %v509, %v513
    %v522 = vsel %vm357, %v503, %v507
    %v523 = vsel %vm357, %v505, %v509
    %v524 = vsel %vm357, %v515, %v503
    %v525 = vsel %vm357, %v517, %v505
    %v526 = vmul.f32 %v295, 0.83333313
    %v527 = vmul.f32 %v301, 0.83333313
    %v528 = vmul.f32 %v307, 0.83333313
    %v529 = vmul.f32 %v313, 0.83333313
    %v530 = vmul.f32 %v296, 0.83333313
    %v531 = vmul.f32 %v302, 0.83333313
    %v532 = vmul.f32 %v308, 0.83333313
    %v533 = vmul.f32 %v314, 0.83333313
    %v534 = vmul.f32 %v526, %v494
    %v535 = vmul.f32 %v527, %v495
    %v536 = vmul.f32 %v528, %v496
    %v537 = vmul.f32 %v529, %v497
    %v538 = vmul.f32 %v530, %v498
    %v539 = vmul.f32 %v531, %v499
    %v540 = vmul.f32 %v532, %v500
    %v541 = vmul.f32 %v533, %v501
    %v542 = vsub.f32 1.3333334, %v526
    %v543 = vsub.f32 1.3333334, %v527
    %v544 = vsub.f32 1.3333334, %v528
    %v545 = vsub.f32 1.3333334, %v529
    %v546 = vsub.f32 1.3333334, %v530
    %v547 = vsub.f32 1.3333334, %v531
    %v548 = vsub.f32 1.3333334, %v532
    %v549 = vsub.f32 1.3333334, %v533
    %v550 = vmul.f32 %v542, %v522
    %v551 = vmul.f32 %v543, %v520
    %v552 = vmul.f32 %v544, %v518
    %v553 = vmul.f32 %v545, %v524
    %v554 = vmul.f32 %v546, %v523
    %v555 = vmul.f32 %v547, %v521
    %v556 = vmul.f32 %v548, %v519
    %v557 = vmul.f32 %v549, %v525
    %v558 = vadd.f32 %v534, %v550
    %v559 = vadd.f32 %v535, %v551
    %v560 = vadd.f32 %v536, %v552
    %v561 = vadd.f32 %v537, %v553
    %v562 = vadd.f32 %v538, %v554
    %v563 = vadd.f32 %v539, %v555
    %v564 = vadd.f32 %v540, %v556
    %v565 = vadd.f32 %v541, %v557
    %566 = vrot.lane.b32.xlu0 %v558, 96
    %v567 = vpop.permute.xlu0 %566
    %568 = vrot.lane.b32.xlu0 %v562, 96
    %v569 = vpop.permute.xlu0 %568
    %570 = vrot.lane.b32.xlu0 %v559, 96
    %v571 = vpop.permute.xlu0 %570
    %572 = vrot.lane.b32.xlu0 %v563, 96
    %v573 = vpop.permute.xlu0 %572
    %574 = vrot.lane.b32.xlu0 %v560, 96
    %v575 = vpop.permute.xlu0 %574
    %576 = vrot.lane.b32.xlu0 %v564, 96
    %v577 = vpop.permute.xlu0 %576
    %578 = vrot.lane.b32.xlu0 %v561, 96
    %v579 = vpop.permute.xlu0 %578
    %580 = vrot.lane.b32.xlu0 %v565, 96
    %v581 = vpop.permute.xlu0 %580
    %v582 = vsel %vm357, %v575, %v579
    %v583 = vsel %vm357, %v577, %v581
    %v584 = vsel %vm357, %v571, %v575
    %v585 = vsel %vm357, %v573, %v577
    %v586 = vsel %vm357, %v567, %v571
    %v587 = vsel %vm357, %v569, %v573
    %v588 = vsel %vm357, %v579, %v567
    %v589 = vsel %vm357, %v581, %v569
    %v590 = vmul.f32 %v295, 0.6249999
    %v591 = vmul.f32 %v301, 0.6249999
    %v592 = vmul.f32 %v307, 0.6249999
    %v593 = vmul.f32 %v313, 0.6249999
    %v594 = vmul.f32 %v296, 0.6249999
    %v595 = vmul.f32 %v302, 0.6249999
    %v596 = vmul.f32 %v308, 0.6249999
    %v597 = vmul.f32 %v314, 0.6249999
    %v598 = vmul.f32 %v590, %v558
    %v599 = vmul.f32 %v591, %v559
    %v600 = vmul.f32 %v592, %v560
    %v601 = vmul.f32 %v593, %v561
    %v602 = vmul.f32 %v594, %v562
    %v603 = vmul.f32 %v595, %v563
    %v604 = vmul.f32 %v596, %v564
    %v605 = vmul.f32 %v597, %v565
    %v606 = vsub.f32 1.25, %v590
    %v607 = vsub.f32 1.25, %v591
    %v608 = vsub.f32 1.25, %v592
    %v609 = vsub.f32 1.25, %v593
    %v610 = vsub.f32 1.25, %v594
    %v611 = vsub.f32 1.25, %v595
    %v612 = vsub.f32 1.25, %v596
    %v613 = vsub.f32 1.25, %v597
    %v614 = vmul.f32 %v606, %v586
    %v615 = vmul.f32 %v607, %v584
    %v616 = vmul.f32 %v608, %v582
    %v617 = vmul.f32 %v609, %v588
    %v618 = vmul.f32 %v610, %v587
    %v619 = vmul.f32 %v611, %v585
    %v620 = vmul.f32 %v612, %v583
    %v621 = vmul.f32 %v613, %v589
    %v622 = vadd.f32 %v598, %v614
    %v623 = vadd.f32 %v599, %v615
    %v624 = vadd.f32 %v600, %v616
    %v625 = vadd.f32 %v601, %v617
    %v626 = vadd.f32 %v602, %v618
    %v627 = vadd.f32 %v603, %v619
    %v628 = vadd.f32 %v604, %v620
    %v629 = vadd.f32 %v605, %v621
    %630 = vrot.lane.b32.xlu0 %v622, 96
    %v631 = vpop.permute.xlu0 %630
    %632 = vrot.lane.b32.xlu0 %v626, 96
    %v633 = vpop.permute.xlu0 %632
    %634 = vrot.lane.b32.xlu0 %v623, 96
    %v635 = vpop.permute.xlu0 %634
    %636 = vrot.lane.b32.xlu0 %v627, 96
    %v637 = vpop.permute.xlu0 %636
    %638 = vrot.lane.b32.xlu0 %v624, 96
    %v639 = vpop.permute.xlu0 %638
    %640 = vrot.lane.b32.xlu0 %v628, 96
    %v641 = vpop.permute.xlu0 %640
    %642 = vrot.lane.b32.xlu0 %v625, 96
    %v643 = vpop.permute.xlu0 %642
    %644 = vrot.lane.b32.xlu0 %v629, 96
    %v645 = vpop.permute.xlu0 %644
    %v646 = vsel %vm357, %v639, %v643
    %v647 = vsel %vm357, %v641, %v645
    %v648 = vsel %vm357, %v635, %v639
    %v649 = vsel %vm357, %v637, %v641
    %v650 = vsel %vm357, %v631, %v635
    %v651 = vsel %vm357, %v633, %v637
    %v652 = vsel %vm357, %v643, %v631
    %v653 = vsel %vm357, %v645, %v633
    %v654 = vmul.f32 %v295, 0.49999988
    %v655 = vmul.f32 %v301, 0.49999988
    %v656 = vmul.f32 %v307, 0.49999988
    %v657 = vmul.f32 %v313, 0.49999988
    %v658 = vmul.f32 %v296, 0.49999988
    %v659 = vmul.f32 %v302, 0.49999988
    %v660 = vmul.f32 %v308, 0.49999988
    %v661 = vmul.f32 %v314, 0.49999988
    %v662 = vmul.f32 %v654, %v622
    %v663 = vmul.f32 %v655, %v623
    %v664 = vmul.f32 %v656, %v624
    %v665 = vmul.f32 %v657, %v625
    %v666 = vmul.f32 %v658, %v626
    %v667 = vmul.f32 %v659, %v627
    %v668 = vmul.f32 %v660, %v628
    %v669 = vmul.f32 %v661, %v629
    %v670 = vsub.f32 1.2, %v654
    %v671 = vsub.f32 1.2, %v655
    %v672 = vsub.f32 1.2, %v656
    %v673 = vsub.f32 1.2, %v657
    %v674 = vsub.f32 1.2, %v658
    %v675 = vsub.f32 1.2, %v659
    %v676 = vsub.f32 1.2, %v660
    %v677 = vsub.f32 1.2, %v661
    %v678 = vmul.f32 %v670, %v650
    %v679 = vmul.f32 %v671, %v648
    %v680 = vmul.f32 %v672, %v646
    %v681 = vmul.f32 %v673, %v652
    %v682 = vmul.f32 %v674, %v651
    %v683 = vmul.f32 %v675, %v649
    %v684 = vmul.f32 %v676, %v647
    %v685 = vmul.f32 %v677, %v653
    %v686 = vadd.f32 %v662, %v678
    %v687 = vadd.f32 %v663, %v679
    %v688 = vadd.f32 %v664, %v680
    %v689 = vadd.f32 %v665, %v681
    %v690 = vadd.f32 %v666, %v682
    %v691 = vadd.f32 %v667, %v683
    %v692 = vadd.f32 %v668, %v684
    %v693 = vadd.f32 %v669, %v685
    %v694 = vxor.u32 %v90, 2147483648
    %v695 = vxor.u32 %v91, 2147483648
    %v696 = vmul.f32 %v694, 1.442695
    %v697 = vpow.pop %v696
    %v698 = vmul.f32 %v695, 1.442695
    %v699 = vpow.pop %v698
    %v700 = vadd.f32 %v697, 1.0
    %v701 = vadd.f32 %v699, 1.0
    %v702 = vrcp.pop %v700
    %v703 = vmul.f32 1.0, %v702
    %v704 = vrcp.pop %v701
    %v705 = vmul.f32 1.0, %v704
    %v706 = vmul.f32 %v90, %v703
    %v707 = vmul.f32 %v91, %v705
    %v708 = vpack.c.bf16 %v707, %v706
    %v709 = vpack.c.bf16 %v690, %v686
    %v710 = vpack.c.bf16 %v691, %v687
    %v711 = vpack.c.bf16 %v692, %v688
    %v712 = vpack.c.bf16 %v693, %v689
    %v777 = vunpack.c.l.b16 %v96
    %v778 = vunpack.c.l.b16 %v97
    %v779 = vunpack.c.l.b16 %v98
    %v780 = vunpack.c.l.b16 %v99
    %v781 = vunpack.c.l.b16 %v100
    %v782 = vunpack.c.l.b16 %v101
    %v783 = vunpack.c.l.b16 %v102
    %v784 = vunpack.c.l.b16 %v103
    %v785 = vunpack.c.l.b16 %v104
    %v786 = vunpack.c.l.b16 %v105
    %v787 = vunpack.c.l.b16 %v106
    %v788 = vunpack.c.l.b16 %v107
    %v789 = vunpack.c.l.b16 %v108
    %v790 = vunpack.c.l.b16 %v109
    %v791 = vunpack.c.l.b16 %v110
    %v792 = vunpack.c.l.b16 %v111
    %v793 = vunpack.c.l.b16 %v112
    %v794 = vunpack.c.l.b16 %v113
    %v795 = vunpack.c.l.b16 %v114
    %v796 = vunpack.c.l.b16 %v115
    %v797 = vunpack.c.l.b16 %v116
    %v798 = vunpack.c.l.b16 %v117
    %v799 = vunpack.c.l.b16 %v118
    %v800 = vunpack.c.l.b16 %v119
    %v801 = vunpack.c.l.b16 %v120
    %v802 = vunpack.c.l.b16 %v121
    %v803 = vunpack.c.l.b16 %v122
    %v804 = vunpack.c.l.b16 %v123
    %v805 = vunpack.c.l.b16 %v124
    %v806 = vunpack.c.l.b16 %v125
    %v807 = vunpack.c.l.b16 %v126
    %v808 = vunpack.c.l.b16 %v127
    %v809 = vunpack.c.l.b16 %v128
    %v810 = vunpack.c.l.b16 %v129
    %v811 = vunpack.c.l.b16 %v130
    %v812 = vunpack.c.l.b16 %v131
    %v813 = vunpack.c.l.b16 %v132
    %v814 = vunpack.c.l.b16 %v133
    %v815 = vunpack.c.l.b16 %v134
    %v816 = vunpack.c.l.b16 %v135
    %v817 = vunpack.c.l.b16 %v136
    %v818 = vunpack.c.l.b16 %v137
    %v819 = vunpack.c.l.b16 %v138
    %v820 = vunpack.c.l.b16 %v139
    %v821 = vunpack.c.l.b16 %v140
    %v822 = vunpack.c.l.b16 %v141
    %v823 = vunpack.c.l.b16 %v142
    %v824 = vunpack.c.l.b16 %v143
    %v825 = vunpack.c.l.b16 %v144
    %v826 = vunpack.c.l.b16 %v145
    %v827 = vunpack.c.l.b16 %v146
    %v828 = vunpack.c.l.b16 %v147
    %v829 = vunpack.c.l.b16 %v148
    %v830 = vunpack.c.l.b16 %v149
    %v831 = vunpack.c.l.b16 %v150
    %v832 = vunpack.c.l.b16 %v151
    %v833 = vunpack.c.l.b16 %v152
    %v834 = vunpack.c.l.b16 %v153
    %v835 = vunpack.c.l.b16 %v154
    %v836 = vunpack.c.l.b16 %v155
    %v837 = vunpack.c.l.b16 %v156
    %v838 = vunpack.c.l.b16 %v157
    %v839 = vunpack.c.l.b16 %v158
    %v840 = vunpack.c.l.b16 %v159
    %v841 = vpack.c.b16 %v778, %v777
    %v842 = vpack.c.b16 %v780, %v779
    %v843 = vpack.c.b16 %v782, %v781
    %v844 = vpack.c.b16 %v784, %v783
    %v845 = vpack.c.b16 %v786, %v785
    %v846 = vpack.c.b16 %v788, %v787
    %v847 = vpack.c.b16 %v790, %v789
    %v848 = vpack.c.b16 %v792, %v791
    %v849 = vpack.c.b16 %v794, %v793
    %v850 = vpack.c.b16 %v796, %v795
    %v851 = vpack.c.b16 %v798, %v797
    %v852 = vpack.c.b16 %v800, %v799
    %v853 = vpack.c.b16 %v802, %v801
    %v854 = vpack.c.b16 %v804, %v803
    %v855 = vpack.c.b16 %v806, %v805
    %v856 = vpack.c.b16 %v808, %v807
    %v857 = vpack.c.b16 %v810, %v809
    %v858 = vpack.c.b16 %v812, %v811
    %v859 = vpack.c.b16 %v814, %v813
    %v860 = vpack.c.b16 %v816, %v815
    %v861 = vpack.c.b16 %v818, %v817
    %v862 = vpack.c.b16 %v820, %v819
    %v863 = vpack.c.b16 %v822, %v821
    %v864 = vpack.c.b16 %v824, %v823
    %v865 = vpack.c.b16 %v826, %v825
    %v866 = vpack.c.b16 %v828, %v827
    %v867 = vpack.c.b16 %v830, %v829
    %v868 = vpack.c.b16 %v832, %v831
    %v869 = vpack.c.b16 %v834, %v833
    %v870 = vpack.c.b16 %v836, %v835
    %v871 = vpack.c.b16 %v838, %v837
    %v872 = vpack.c.b16 %v840, %v839
    %905 = vmatprep.subr.bf16.mxu0 0
    %906 = vmatpush1.bf16.msra.mxu0 %v841
    %907 = vmatprep.subr.bf16.mxu0 0
    %908 = vmatpush1.bf16.msra.mxu0 %v842
    %909 = vmatprep.subr.bf16.mxu0 0
    %910 = vmatpush1.bf16.msra.mxu0 %v843
    %911 = vmatprep.subr.bf16.mxu0 0
    %912 = vmatpush1.bf16.msra.mxu0 %v844
    %913 = vmatprep.subr.bf16.mxu0 0
    %914 = vmatpush1.bf16.msra.mxu0 %v845
    %915 = vmatprep.subr.bf16.mxu0 0
    %916 = vmatpush1.bf16.msra.mxu0 %v846
    %917 = vmatprep.subr.bf16.mxu0 0
    %918 = vmatpush1.bf16.msra.mxu0 %v847
    %919 = vmatprep.subr.bf16.mxu0 0
    %920 = vmatpush1.bf16.msra.mxu0 %v848
    %921 = vmatprep.subr.bf16.mxu0 0
    %922 = vmatpush1.bf16.msra.mxu0 %v849
    %923 = vmatprep.subr.bf16.mxu0 0
    %924 = vmatpush1.bf16.msra.mxu0 %v850
    %925 = vmatprep.subr.bf16.mxu0 0
    %926 = vmatpush1.bf16.msra.mxu0 %v851
    %927 = vmatprep.subr.bf16.mxu0 0
    %928 = vmatpush1.bf16.msra.mxu0 %v852
    %929 = vmatprep.subr.bf16.mxu0 0
    %930 = vmatpush1.bf16.msra.mxu0 %v853
    %931 = vmatprep.subr.bf16.mxu0 0
    %932 = vmatpush1.bf16.msra.mxu0 %v854
    %933 = vmatprep.subr.bf16.mxu0 0
    %934 = vmatpush1.bf16.msra.mxu0 %v855
    %935 = vmatprep.subr.bf16.mxu0 0
    %936 = vmatpush1.bf16.msra.mxu0 %v856
    %937 = vmatprep.mubr.bf16.mxu0 %v710
    %938 = vmatmul.mubr.bf16.gmra.mrb[0].mxu0 %v709
    %v939 = vpop.f32.mrb[0].mxu0
    %v940 = vadd.f32 0.0, %v939
    %v941 = vpop.f32.mrb[0].mxu0
    %v942 = vpop.f32.mrb[0].mxu0
    %v943 = vadd.f32 0.0, %v942
    %v944 = vpop.f32.mrb[0].mxu0
    %945 = vdwg.mxu0
    %946 = vmatprep.subr.bf16.mxu0 0
    %947 = vmatpush1.bf16.msra.mxu0 %v857
    %948 = vmatprep.subr.bf16.mxu0 0
    %949 = vmatpush1.bf16.msra.mxu0 %v858
    %950 = vmatprep.subr.bf16.mxu0 0
    %951 = vmatpush1.bf16.msra.mxu0 %v859
    %952 = vmatprep.subr.bf16.mxu0 0
    %953 = vmatpush1.bf16.msra.mxu0 %v860
    %954 = vmatprep.subr.bf16.mxu0 0
    %955 = vmatpush1.bf16.msra.mxu0 %v861
    %956 = vmatprep.subr.bf16.mxu0 0
    %957 = vmatpush1.bf16.msra.mxu0 %v862
    %958 = vmatprep.subr.bf16.mxu0 0
    %959 = vmatpush1.bf16.msra.mxu0 %v863
    %960 = vmatprep.subr.bf16.mxu0 0
    %961 = vmatpush1.bf16.msra.mxu0 %v864
    %962 = vmatprep.subr.bf16.mxu0 0
    %963 = vmatpush1.bf16.msra.mxu0 %v865
    %964 = vmatprep.subr.bf16.mxu0 0
    %965 = vmatpush1.bf16.msra.mxu0 %v866
    %966 = vmatprep.subr.bf16.mxu0 0
    %967 = vmatpush1.bf16.msra.mxu0 %v867
    %968 = vmatprep.subr.bf16.mxu0 0
    %969 = vmatpush1.bf16.msra.mxu0 %v868
    %970 = vmatprep.subr.bf16.mxu0 0
    %971 = vmatpush1.bf16.msra.mxu0 %v869
    %972 = vmatprep.subr.bf16.mxu0 0
    %973 = vmatpush1.bf16.msra.mxu0 %v870
    %974 = vmatprep.subr.bf16.mxu0 0
    %975 = vmatpush1.bf16.msra.mxu0 %v871
    %976 = vmatprep.subr.bf16.mxu0 0
    %977 = vmatpush1.bf16.msra.mxu0 %v872
    %978 = vmatprep.mubr.bf16.mxu0 %v712
    %979 = vmatmul.mubr.bf16.gmra.mrb[0].mxu0 %v711
    %v980 = vpop.f32.mrb[0].mxu0
    %v981 = vadd.f32 %v940, %v980
    %v982 = vpop.f32.mrb[0].mxu0
    %v983 = vpop.f32.mrb[0].mxu0
    %v984 = vadd.f32 %v943, %v983
    %v985 = vpop.f32.mrb[0].mxu0
    %986 = vdwg.mxu0
    %v991 = vunpack.c.l.b16 %v92
    %v992 = vunpack.c.l.b16 %v93
    %v993 = vunpack.c.l.b16 %v94
    %v994 = vunpack.c.l.b16 %v95
    %v995 = vpack.c.b16 %v992, %v991
    %v996 = vpack.c.b16 %v994, %v993
    %v1000 = vsel %vm288, %v708, 0
    %1002 = vmatprep.subr.bf16.mxu0 0
    %1003 = vmatpush1.bf16.msra.mxu0 %v995
    %1004 = vmatprep.subr.bf16.mxu0 0
    %1005 = vmatpush1.bf16.msra.mxu0 %v996
    %1006 = vmatprep.subr.bf16.mxu0 0
    %1007 = vmatpush1.bf16.msra.mxu0 0
    %1008 = vmatprep.subr.bf16.mxu0 0
    %1009 = vmatpush1.bf16.msra.mxu0 0
    %1010 = vmatprep.subr.bf16.mxu0 0
    %1011 = vmatpush1.bf16.msra.mxu0 0
    %1012 = vmatprep.subr.bf16.mxu0 0
    %1013 = vmatpush1.bf16.msra.mxu0 0
    %1014 = vmatprep.subr.bf16.mxu0 0
    %1015 = vmatpush1.bf16.msra.mxu0 0
    %1016 = vmatprep.subr.bf16.mxu0 0
    %1017 = vmatpush1.bf16.msra.mxu0 0
    %1018 = vmatprep.subr.bf16.mxu0 0
    %1019 = vmatpush1.bf16.msra.mxu0 0
    %1020 = vmatprep.subr.bf16.mxu0 0
    %1021 = vmatpush1.bf16.msra.mxu0 0
    %1022 = vmatprep.subr.bf16.mxu0 0
    %1023 = vmatpush1.bf16.msra.mxu0 0
    %1024 = vmatprep.subr.bf16.mxu0 0
    %1025 = vmatpush1.bf16.msra.mxu0 0
    %1026 = vmatprep.subr.bf16.mxu0 0
    %1027 = vmatpush1.bf16.msra.mxu0 0
    %1028 = vmatprep.subr.bf16.mxu0 0
    %1029 = vmatpush1.bf16.msra.mxu0 0
    %1030 = vmatprep.subr.bf16.mxu0 0
    %1031 = vmatpush1.bf16.msra.mxu0 0
    %1032 = vmatprep.subr.bf16.mxu0 0
    %1033 = vmatpush1.bf16.msra.mxu0 0
    %1034 = vmatprep.mubr.bf16.mxu0 0
    %1035 = vmatmul.mubr.bf16.gmra.mrb[0].mxu0 %v1000
    %v1036 = vpop.f32.mrb[0].mxu0
    %v1037 = vadd.f32 %v981, %v1036
    %v1038 = vpop.f32.mrb[0].mxu0
    %v1039 = vpop.f32.mrb[0].mxu0
    %v1040 = vadd.f32 %v984, %v1039
    %v1041 = vpop.f32.mrb[0].mxu0
    %1042 = vdwg.mxu0
    %v1043 = vld [vmem:[#allocation8] sm:$0xf]
    %v1044 = vld [vmem:[#allocation8 + $0x4] sm:$0xf]
    %v1045 = vld [vmem:[#allocation8 + $0x8] sm:$0xf]
    %v1046 = vld [vmem:[#allocation8 + $0xc] sm:$0xf]
    %v1047 = vld [vmem:[#allocation8 + $0x10] sm:$0xf]
    %v1048 = vld [vmem:[#allocation8 + $0x14] sm:$0xf]
    %v1049 = vld [vmem:[#allocation8 + $0x18] sm:$0xf]
    %v1050 = vld [vmem:[#allocation8 + $0x1c] sm:$0xf]
    %v1051 = vld [vmem:[#allocation10] sm:$0xf]
    %v1052 = vld [vmem:[#allocation10 + $0x4] sm:$0xf]
    %v1053 = vld [vmem:[#allocation10 + $0x8] sm:$0xf]
    %v1054 = vld [vmem:[#allocation10 + $0xc] sm:$0xf]
    %v1055 = vld [vmem:[#allocation10 + $0x10] sm:$0xf]
    %v1056 = vld [vmem:[#allocation10 + $0x14] sm:$0xf]
    %v1057 = vld [vmem:[#allocation10 + $0x18] sm:$0xf]
    %v1058 = vld [vmem:[#allocation10 + $0x1c] sm:$0xf]
    %v1059 = vld [vmem:[#allocation10 + $0x20] sm:$0xf]
    %v1060 = vld [vmem:[#allocation10 + $0x24] sm:$0xf]
    %v1061 = vld [vmem:[#allocation10 + $0x28] sm:$0xf]
    %v1062 = vld [vmem:[#allocation10 + $0x2c] sm:$0xf]
    %v1063 = vld [vmem:[#allocation10 + $0x30] sm:$0xf]
    %v1064 = vld [vmem:[#allocation10 + $0x34] sm:$0xf]
    %v1065 = vld [vmem:[#allocation10 + $0x38] sm:$0xf]
    %v1066 = vld [vmem:[#allocation10 + $0x3c] sm:$0xf]
    %v1067 = vld [vmem:[#allocation10 + $0x40] sm:$0xf]
    %v1068 = vld [vmem:[#allocation10 + $0x44] sm:$0xf]
    %v1069 = vld [vmem:[#allocation10 + $0x48] sm:$0xf]
    %v1070 = vld [vmem:[#allocation10 + $0x4c] sm:$0xf]
    %v1071 = vld [vmem:[#allocation10 + $0x50] sm:$0xf]
    %v1072 = vld [vmem:[#allocation10 + $0x54] sm:$0xf]
    %v1073 = vld [vmem:[#allocation10 + $0x58] sm:$0xf]
    %v1074 = vld [vmem:[#allocation10 + $0x5c] sm:$0xf]
    %v1075 = vld [vmem:[#allocation10 + $0x60] sm:$0xf]
    %v1076 = vld [vmem:[#allocation10 + $0x64] sm:$0xf]
    %v1077 = vld [vmem:[#allocation10 + $0x68] sm:$0xf]
    %v1078 = vld [vmem:[#allocation10 + $0x6c] sm:$0xf]
    %v1079 = vld [vmem:[#allocation10 + $0x70] sm:$0xf]
    %v1080 = vld [vmem:[#allocation10 + $0x74] sm:$0xf]
    %v1081 = vld [vmem:[#allocation10 + $0x78] sm:$0xf]
    %v1082 = vld [vmem:[#allocation10 + $0x7c] sm:$0xf]
    %v1083 = vld [vmem:[#allocation10 + $0x80] sm:$0xf]
    %v1084 = vld [vmem:[#allocation10 + $0x84] sm:$0xf]
    %v1085 = vld [vmem:[#allocation10 + $0x88] sm:$0xf]
    %v1086 = vld [vmem:[#allocation10 + $0x8c] sm:$0xf]
    %v1087 = vld [vmem:[#allocation10 + $0x90] sm:$0xf]
    %v1088 = vld [vmem:[#allocation10 + $0x94] sm:$0xf]
    %v1089 = vld [vmem:[#allocation10 + $0x98] sm:$0xf]
    %v1090 = vld [vmem:[#allocation10 + $0x9c] sm:$0xf]
    %v1091 = vld [vmem:[#allocation10 + $0xa0] sm:$0xf]
    %v1092 = vld [vmem:[#allocation10 + $0xa4] sm:$0xf]
    %v1093 = vld [vmem:[#allocation10 + $0xa8] sm:$0xf]
    %v1094 = vld [vmem:[#allocation10 + $0xac] sm:$0xf]
    %v1095 = vld [vmem:[#allocation10 + $0xb0] sm:$0xf]
    %v1096 = vld [vmem:[#allocation10 + $0xb4] sm:$0xf]
    %v1097 = vld [vmem:[#allocation10 + $0xb8] sm:$0xf]
    %v1098 = vld [vmem:[#allocation10 + $0xbc] sm:$0xf]
    %v1099 = vld [vmem:[#allocation10 + $0xc0] sm:$0xf]
    %v1100 = vld [vmem:[#allocation10 + $0xc4] sm:$0xf]
    %v1101 = vld [vmem:[#allocation10 + $0xc8] sm:$0xf]
    %v1102 = vld [vmem:[#allocation10 + $0xcc] sm:$0xf]
    %v1103 = vld [vmem:[#allocation10 + $0xd0] sm:$0xf]
    %v1104 = vld [vmem:[#allocation10 + $0xd4] sm:$0xf]
    %v1105 = vld [vmem:[#allocation10 + $0xd8] sm:$0xf]
    %v1106 = vld [vmem:[#allocation10 + $0xdc] sm:$0xf]
    %v1107 = vld [vmem:[#allocation10 + $0xe0] sm:$0xf]
    %v1108 = vld [vmem:[#allocation10 + $0xe4] sm:$0xf]
    %v1109 = vld [vmem:[#allocation10 + $0xe8] sm:$0xf]
    %v1110 = vld [vmem:[#allocation10 + $0xec] sm:$0xf]
    %v1111 = vld [vmem:[#allocation10 + $0xf0] sm:$0xf]
    %v1112 = vld [vmem:[#allocation10 + $0xf4] sm:$0xf]
    %v1113 = vld [vmem:[#allocation10 + $0xf8] sm:$0xf]
    %v1114 = vld [vmem:[#allocation10 + $0xfc] sm:$0xf]
    %v1115 = vld [vmem:[#allocation10 + $0x100] sm:$0xf]
    %v1116 = vld [vmem:[#allocation10 + $0x104] sm:$0xf]
    %v1117 = vld [vmem:[#allocation10 + $0x108] sm:$0xf]
    %v1118 = vld [vmem:[#allocation10 + $0x10c] sm:$0xf]
    %v1119 = vld [vmem:[#allocation10 + $0x110] sm:$0xf]
    %v1120 = vld [vmem:[#allocation10 + $0x114] sm:$0xf]
    %v1121 = vld [vmem:[#allocation10 + $0x118] sm:$0xf]
    %v1122 = vld [vmem:[#allocation10 + $0x11c] sm:$0xf]
    %v1123 = vld [vmem:[#allocation10 + $0x120] sm:$0xf]
    %v1124 = vld [vmem:[#allocation10 + $0x124] sm:$0xf]
    %v1125 = vld [vmem:[#allocation10 + $0x128] sm:$0xf]
    %v1126 = vld [vmem:[#allocation10 + $0x12c] sm:$0xf]
    %v1127 = vld [vmem:[#allocation10 + $0x130] sm:$0xf]
    %v1128 = vld [vmem:[#allocation10 + $0x134] sm:$0xf]
    %v1129 = vld [vmem:[#allocation10 + $0x138] sm:$0xf]
    %v1130 = vld [vmem:[#allocation10 + $0x13c] sm:$0xf]
    %v1131 = vld [vmem:[#allocation10 + $0x140] sm:$0xf]
    %v1132 = vld [vmem:[#allocation10 + $0x144] sm:$0xf]
    %v1133 = vld [vmem:[#allocation10 + $0x148] sm:$0xf]
    %v1134 = vld [vmem:[#allocation10 + $0x14c] sm:$0xf]
    %v1135 = vld [vmem:[#allocation10 + $0x150] sm:$0xf]
    %v1136 = vld [vmem:[#allocation10 + $0x154] sm:$0xf]
    %v1137 = vld [vmem:[#allocation10 + $0x158] sm:$0xf]
    %v1138 = vld [vmem:[#allocation10 + $0x15c] sm:$0xf]
    %v1139 = vld [vmem:[#allocation10 + $0x160] sm:$0xf]
    %v1140 = vld [vmem:[#allocation10 + $0x164] sm:$0xf]
    %v1141 = vld [vmem:[#allocation10 + $0x168] sm:$0xf]
    %v1142 = vld [vmem:[#allocation10 + $0x16c] sm:$0xf]
    %v1143 = vld [vmem:[#allocation10 + $0x170] sm:$0xf]
    %v1144 = vld [vmem:[#allocation10 + $0x174] sm:$0xf]
    %v1145 = vld [vmem:[#allocation10 + $0x178] sm:$0xf]
    %v1146 = vld [vmem:[#allocation10 + $0x17c] sm:$0xf]
    %v1147 = vld [vmem:[#allocation10 + $0x180] sm:$0xf]
    %v1148 = vld [vmem:[#allocation10 + $0x184] sm:$0xf]
    %v1149 = vld [vmem:[#allocation10 + $0x188] sm:$0xf]
    %v1150 = vld [vmem:[#allocation10 + $0x18c] sm:$0xf]
    %v1151 = vld [vmem:[#allocation10 + $0x190] sm:$0xf]
    %v1152 = vld [vmem:[#allocation10 + $0x194] sm:$0xf]
    %v1153 = vld [vmem:[#allocation10 + $0x198] sm:$0xf]
    %v1154 = vld [vmem:[#allocation10 + $0x19c] sm:$0xf]
    %v1155 = vld [vmem:[#allocation10 + $0x1a0] sm:$0xf]
    %v1156 = vld [vmem:[#allocation10 + $0x1a4] sm:$0xf]
    %v1157 = vld [vmem:[#allocation10 + $0x1a8] sm:$0xf]
    %v1158 = vld [vmem:[#allocation10 + $0x1ac] sm:$0xf]
    %v1159 = vld [vmem:[#allocation10 + $0x1b0] sm:$0xf]
    %v1160 = vld [vmem:[#allocation10 + $0x1b4] sm:$0xf]
    %v1161 = vld [vmem:[#allocation10 + $0x1b8] sm:$0xf]
    %v1162 = vld [vmem:[#allocation10 + $0x1bc] sm:$0xf]
    %v1163 = vld [vmem:[#allocation10 + $0x1c0] sm:$0xf]
    %v1164 = vld [vmem:[#allocation10 + $0x1c4] sm:$0xf]
    %v1165 = vld [vmem:[#allocation10 + $0x1c8] sm:$0xf]
    %v1166 = vld [vmem:[#allocation10 + $0x1cc] sm:$0xf]
    %v1167 = vld [vmem:[#allocation10 + $0x1d0] sm:$0xf]
    %v1168 = vld [vmem:[#allocation10 + $0x1d4] sm:$0xf]
    %v1169 = vld [vmem:[#allocation10 + $0x1d8] sm:$0xf]
    %v1170 = vld [vmem:[#allocation10 + $0x1dc] sm:$0xf]
    %v1171 = vld [vmem:[#allocation10 + $0x1e0] sm:$0xf]
    %v1172 = vld [vmem:[#allocation10 + $0x1e4] sm:$0xf]
    %v1173 = vld [vmem:[#allocation10 + $0x1e8] sm:$0xf]
    %v1174 = vld [vmem:[#allocation10 + $0x1ec] sm:$0xf]
    %v1175 = vld [vmem:[#allocation10 + $0x1f0] sm:$0xf]
    %v1176 = vld [vmem:[#allocation10 + $0x1f4] sm:$0xf]
    %v1177 = vld [vmem:[#allocation10 + $0x1f8] sm:$0xf]
    %v1178 = vld [vmem:[#allocation10 + $0x1fc] sm:$0xf]
    %v1179 = vsub.f32 %v1037, -3.0
    %v1180 = vsub.f32 %v1040, -3.0
    %v1181 = vsub.f32 %v1037, -2.6
    %v1182 = vsub.f32 %v1040, -2.6
    %v1183 = vsub.f32 %v1037, -2.1999998
    %v1184 = vsub.f32 %v1040, -2.1999998
    %v1185 = vsub.f32 %v1037, -1.7999997
    %v1186 = vsub.f32 %v1040, -1.7999997
    %v1187 = vsub.f32 %v1037, -1.3999996
    %v1188 = vsub.f32 %v1040, -1.3999996
    %v1189 = vsub.f32 %v1037, -0.9999995
    %v1190 = vsub.f32 %v1040, -0.9999995
    %v1191 = vsub.f32 %v1037, -0.5999994
    %v1192 = vsub.f32 %v1040, -0.5999994
    %v1193 = vsub.f32 %v1037, -0.19999933
    %v1194 = vsub.f32 %v1040, -0.19999933
    %v1195 = vsub.f32 %v1037, 0.20000076
    %v1196 = vsub.f32 %v1040, 0.20000076
    %v1197 = vsub.f32 %v1037, 0.60000086
    %v1198 = vsub.f32 %v1040, 0.60000086
    %v1199 = vsub.f32 %v1037, 1.000001
    %v1200 = vsub.f32 %v1040, 1.000001
    %v1201 = vsub.f32 %v1037, 1.400001
    %v1202 = vsub.f32 %v1040, 1.400001
    %v1203 = vsub.f32 %v1037, 1.8000011
    %v1204 = vsub.f32 %v1040, 1.8000011
    %v1205 = vsub.f32 %v1037, 2.2000012
    %v1206 = vsub.f32 %v1040, 2.2000012
    %v1207 = vsub.f32 %v1037, 2.6000013
    %v1208 = vsub.f32 %v1040, 2.6000013
    %v1209 = vsub.f32 %v1037, 3.0000014
    %v1210 = vsub.f32 %v1040, 3.0000014
    %1213 = vrot.lane.b32.xlu0 %v1181, 64
    %v1214 = vpop.permute.xlu0 %1213
    %1215 = vrot.lane.b32.xlu0 %v1182, 64
    %v1216 = vpop.permute.xlu0 %1215
    %1221 = vrot.lane.b32.xlu0 %v1185, 64
    %v1222 = vpop.permute.xlu0 %1221
    %1223 = vrot.lane.b32.xlu0 %v1186, 64
    %v1224 = vpop.permute.xlu0 %1223
    %1229 = vrot.lane.b32.xlu0 %v1189, 64
    %v1230 = vpop.permute.xlu0 %1229
    %1231 = vrot.lane.b32.xlu0 %v1190, 64
    %v1232 = vpop.permute.xlu0 %1231
    %1237 = vrot.lane.b32.xlu0 %v1193, 64
    %v1238 = vpop.permute.xlu0 %1237
    %1239 = vrot.lane.b32.xlu0 %v1194, 64
    %v1240 = vpop.permute.xlu0 %1239
    %1245 = vrot.lane.b32.xlu0 %v1197, 64
    %v1246 = vpop.permute.xlu0 %1245
    %1247 = vrot.lane.b32.xlu0 %v1198, 64
    %v1248 = vpop.permute.xlu0 %1247
    %1253 = vrot.lane.b32.xlu0 %v1201, 64
    %v1254 = vpop.permute.xlu0 %1253
    %1255 = vrot.lane.b32.xlu0 %v1202, 64
    %v1256 = vpop.permute.xlu0 %1255
    %1261 = vrot.lane.b32.xlu0 %v1205, 64
    %v1262 = vpop.permute.xlu0 %1261
    %1263 = vrot.lane.b32.xlu0 %v1206, 64
    %v1264 = vpop.permute.xlu0 %1263
    %1269 = vrot.lane.b32.xlu0 %v1209, 64
    %v1270 = vpop.permute.xlu0 %1269
    %1271 = vrot.lane.b32.xlu0 %v1210, 64
    %v1272 = vpop.permute.xlu0 %1271
    %v1275 = vsel %vm291, %v1179, %v1214
    %v1276 = vsel %vm291, %v1180, %v1216
    %v1277 = vsel %vm291, %v1183, %v1222
    %v1278 = vsel %vm291, %v1184, %v1224
    %v1279 = vsel %vm291, %v1187, %v1230
    %v1280 = vsel %vm291, %v1188, %v1232
    %v1281 = vsel %vm291, %v1191, %v1238
    %v1282 = vsel %vm291, %v1192, %v1240
    %v1283 = vsel %vm291, %v1195, %v1246
    %v1284 = vsel %vm291, %v1196, %v1248
    %v1285 = vsel %vm291, %v1199, %v1254
    %v1286 = vsel %vm291, %v1200, %v1256
    %v1287 = vsel %vm291, %v1203, %v1262
    %v1288 = vsel %vm291, %v1204, %v1264
    %v1289 = vsel %vm291, %v1207, %v1270
    %v1290 = vsel %vm291, %v1208, %v1272
    %vm1291 = vcmp.ge.f32.partialorder %v1275, 0.0
    %vm1292 = vcmp.ge.f32.partialorder %v1277, 0.0
    %vm1293 = vcmp.ge.f32.partialorder %v1279, 0.0
    %vm1294 = vcmp.ge.f32.partialorder %v1281, 0.0
    %vm1295 = vcmp.ge.f32.partialorder %v1283, 0.0
    %vm1296 = vcmp.ge.f32.partialorder %v1285, 0.0
    %vm1297 = vcmp.ge.f32.partialorder %v1287, 0.0
    %vm1298 = vcmp.ge.f32.partialorder %v1289, 0.0
    %vm1299 = vcmp.ge.f32.partialorder %v1276, 0.0
    %vm1300 = vcmp.ge.f32.partialorder %v1278, 0.0
    %vm1301 = vcmp.ge.f32.partialorder %v1280, 0.0
    %vm1302 = vcmp.ge.f32.partialorder %v1282, 0.0
    %vm1303 = vcmp.ge.f32.partialorder %v1284, 0.0
    %vm1304 = vcmp.ge.f32.partialorder %v1286, 0.0
    %vm1305 = vcmp.ge.f32.partialorder %v1288, 0.0
    %vm1306 = vcmp.ge.f32.partialorder %v1290, 0.0
    %v1307 = vsel %vm1291, 1, 0
    %v1308 = vsel %vm1292, 1, 0
    %v1309 = vsel %vm1293, 1, 0
    %v1310 = vsel %vm1294, 1, 0
    %v1311 = vsel %vm1295, 1, 0
    %v1312 = vsel %vm1296, 1, 0
    %v1313 = vsel %vm1297, 1, 0
    %v1314 = vsel %vm1298, 1, 0
    %v1315 = vsel %vm1299, 1, 0
    %v1316 = vsel %vm1300, 1, 0
    %v1317 = vsel %vm1301, 1, 0
    %v1318 = vsel %vm1302, 1, 0
    %v1319 = vsel %vm1303, 1, 0
    %v1320 = vsel %vm1304, 1, 0
    %v1321 = vsel %vm1305, 1, 0
    %v1322 = vsel %vm1306, 1, 0
    %v1323 = vcvt.s32.f32 %v1307
    %v1324 = vcvt.s32.f32 %v1308
    %v1325 = vcvt.s32.f32 %v1309
    %v1326 = vcvt.s32.f32 %v1310
    %v1327 = vcvt.s32.f32 %v1311
    %v1328 = vcvt.s32.f32 %v1312
    %v1329 = vcvt.s32.f32 %v1313
    %v1330 = vcvt.s32.f32 %v1314
    %v1331 = vcvt.s32.f32 %v1315
    %v1332 = vcvt.s32.f32 %v1316
    %v1333 = vcvt.s32.f32 %v1317
    %v1334 = vcvt.s32.f32 %v1318
    %v1335 = vcvt.s32.f32 %v1319
    %v1336 = vcvt.s32.f32 %v1320
    %v1337 = vcvt.s32.f32 %v1321
    %v1338 = vcvt.s32.f32 %v1322
    %1339 = vrot.lane.b32.xlu0 %v1323, 64
    %v1340 = vpop.permute.xlu0 %1339
    %1341 = vrot.lane.b32.xlu0 %v1331, 64
    %v1342 = vpop.permute.xlu0 %1341
    %1343 = vrot.lane.b32.xlu0 %v1324, 64
    %v1344 = vpop.permute.xlu0 %1343
    %1345 = vrot.lane.b32.xlu0 %v1332, 64
    %v1346 = vpop.permute.xlu0 %1345
    %1347 = vrot.lane.b32.xlu0 %v1325, 64
    %v1348 = vpop.permute.xlu0 %1347
    %1349 = vrot.lane.b32.xlu0 %v1333, 64
    %v1350 = vpop.permute.xlu0 %1349
    %1351 = vrot.lane.b32.xlu0 %v1326, 64
    %v1352 = vpop.permute.xlu0 %1351
    %1353 = vrot.lane.b32.xlu0 %v1334, 64
    %v1354 = vpop.permute.xlu0 %1353
    %1355 = vrot.lane.b32.xlu0 %v1327, 64
    %v1356 = vpop.permute.xlu0 %1355
    %1357 = vrot.lane.b32.xlu0 %v1335, 64
    %v1358 = vpop.permute.xlu0 %1357
    %1359 = vrot.lane.b32.xlu0 %v1328, 64
    %v1360 = vpop.permute.xlu0 %1359
    %1361 = vrot.lane.b32.xlu0 %v1336, 64
    %v1362 = vpop.permute.xlu0 %1361
    %1363 = vrot.lane.b32.xlu0 %v1329, 64
    %v1364 = vpop.permute.xlu0 %1363
    %1365 = vrot.lane.b32.xlu0 %v1337, 64
    %v1366 = vpop.permute.xlu0 %1365
    %1367 = vrot.lane.b32.xlu0 %v1330, 64
    %v1368 = vpop.permute.xlu0 %1367
    %1369 = vrot.lane.b32.xlu0 %v1338, 64
    %v1370 = vpop.permute.xlu0 %1369
    %vm1371 = vcmp.lt.s32.totalorder %v356, 64
    %v1372 = vsel %vm1371, %v1364, %v1368
    %v1373 = vsel %vm1371, %v1366, %v1370
    %v1374 = vsel %vm1371, %v1360, %v1364
    %v1375 = vsel %vm1371, %v1362, %v1366
    %v1376 = vsel %vm1371, %v1356, %v1360
    %v1377 = vsel %vm1371, %v1358, %v1362
    %v1378 = vsel %vm1371, %v1352, %v1356
    %v1379 = vsel %vm1371, %v1354, %v1358
    %v1380 = vsel %vm1371, %v1348, %v1352
    %v1381 = vsel %vm1371, %v1350, %v1354
    %v1382 = vsel %vm1371, %v1344, %v1348
    %v1383 = vsel %vm1371, %v1346, %v1350
    %v1384 = vsel %vm1371, %v1340, %v1344
    %v1385 = vsel %vm1371, %v1342, %v1346
    %v1386 = vsel %vm1371, %v1368, %v1340
    %v1387 = vsel %vm1371, %v1370, %v1342
    %v1388 = vsub.f32 %v1323, %v1384
    %v1389 = vsub.f32 %v1324, %v1382
    %v1390 = vsub.f32 %v1325, %v1380
    %v1391 = vsub.f32 %v1326, %v1378
    %v1392 = vsub.f32 %v1327, %v1376
    %v1393 = vsub.f32 %v1328, %v1374
    %v1394 = vsub.f32 %v1329, %v1372
    %v1395 = vsub.f32 %v1330, %v1386
    %v1396 = vsub.f32 %v1331, %v1385
    %v1397 = vsub.f32 %v1332, %v1383
    %v1398 = vsub.f32 %v1333, %v1381
    %v1399 = vsub.f32 %v1334, %v1379
    %v1400 = vsub.f32 %v1335, %v1377
    %v1401 = vsub.f32 %v1336, %v1375
    %v1402 = vsub.f32 %v1337, %v1373
    %v1403 = vsub.f32 %v1338, %v1387
    %1404 = vrot.lane.b32.xlu0 %v1388, 64
    %v1405 = vpop.permute.xlu0 %1404
    %1406 = vrot.lane.b32.xlu0 %v1396, 64
    %v1407 = vpop.permute.xlu0 %1406
    %1408 = vrot.lane.b32.xlu0 %v1389, 64
    %v1409 = vpop.permute.xlu0 %1408
    %1410 = vrot.lane.b32.xlu0 %v1397, 64
    %v1411 = vpop.permute.xlu0 %1410
    %1412 = vrot.lane.b32.xlu0 %v1390, 64
    %v1413 = vpop.permute.xlu0 %1412
    %1414 = vrot.lane.b32.xlu0 %v1398, 64
    %v1415 = vpop.permute.xlu0 %1414
    %1416 = vrot.lane.b32.xlu0 %v1391, 64
    %v1417 = vpop.permute.xlu0 %1416
    %1418 = vrot.lane.b32.xlu0 %v1399, 64
    %v1419 = vpop.permute.xlu0 %1418
    %1420 = vrot.lane.b32.xlu0 %v1392, 64
    %v1421 = vpop.permute.xlu0 %1420
    %1422 = vrot.lane.b32.xlu0 %v1400, 64
    %v1423 = vpop.permute.xlu0 %1422
    %1424 = vrot.lane.b32.xlu0 %v1393, 64
    %v1425 = vpop.permute.xlu0 %1424
    %1426 = vrot.lane.b32.xlu0 %v1401, 64
    %v1427 = vpop.permute.xlu0 %1426
    %1428 = vrot.lane.b32.xlu0 %v1394, 64
    %v1429 = vpop.permute.xlu0 %1428
    %1430 = vrot.lane.b32.xlu0 %v1402, 64
    %v1431 = vpop.permute.xlu0 %1430
    %1432 = vrot.lane.b32.xlu0 %v1395, 64
    %v1433 = vpop.permute.xlu0 %1432
    %1434 = vrot.lane.b32.xlu0 %v1403, 64
    %v1435 = vpop.permute.xlu0 %1434
    %v1436 = vsel %vm1371, %v1429, %v1433
    %v1437 = vsel %vm1371, %v1431, %v1435
    %v1438 = vsel %vm1371, %v1425, %v1429
    %v1439 = vsel %vm1371, %v1427, %v1431
    %v1440 = vsel %vm1371, %v1421, %v1425
    %v1441 = vsel %vm1371, %v1423, %v1427
    %v1442 = vsel %vm1371, %v1417, %v1421
    %v1443 = vsel %vm1371, %v1419, %v1423
    %v1444 = vsel %vm1371, %v1413, %v1417
    %v1445 = vsel %vm1371, %v1415, %v1419
    %v1446 = vsel %vm1371, %v1409, %v1413
    %v1447 = vsel %vm1371, %v1411, %v1415
    %v1448 = vsel %vm1371, %v1405, %v1409
    %v1449 = vsel %vm1371, %v1407, %v1411
    %v1450 = vsel %vm1371, %v1433, %v1405
    %v1451 = vsel %vm1371, %v1435, %v1407
    %v1452 = vmul.f32 %v1275, 2.4999995
    %v1453 = vmul.f32 %v1277, 2.4999995
    %v1454 = vmul.f32 %v1279, 2.4999995
    %v1455 = vmul.f32 %v1281, 2.4999995
    %v1456 = vmul.f32 %v1283, 2.4999995
    %v1457 = vmul.f32 %v1285, 2.4999995
    %v1458 = vmul.f32 %v1287, 2.4999995
    %v1459 = vmul.f32 %v1289, 2.4999995
    %v1460 = vmul.f32 %v1276, 2.4999995
    %v1461 = vmul.f32 %v1278, 2.4999995
    %v1462 = vmul.f32 %v1280, 2.4999995
    %v1463 = vmul.f32 %v1282, 2.4999995
    %v1464 = vmul.f32 %v1284, 2.4999995
    %v1465 = vmul.f32 %v1286, 2.4999995
    %v1466 = vmul.f32 %v1288, 2.4999995
    %v1467 = vmul.f32 %v1290, 2.4999995
    %v1468 = vmul.f32 %v1452, %v1388
    %v1469 = vmul.f32 %v1453, %v1389
    %v1470 = vmul.f32 %v1454, %v1390
    %v1471 = vmul.f32 %v1455, %v1391
    %v1472 = vmul.f32 %v1456, %v1392
    %v1473 = vmul.f32 %v1457, %v1393
    %v1474 = vmul.f32 %v1458, %v1394
    %v1475 = vmul.f32 %v1459, %v1395
    %v1476 = vmul.f32 %v1460, %v1396
    %v1477 = vmul.f32 %v1461, %v1397
    %v1478 = vmul.f32 %v1462, %v1398
    %v1479 = vmul.f32 %v1463, %v1399
    %v1480 = vmul.f32 %v1464, %v1400
    %v1481 = vmul.f32 %v1465, %v1401
    %v1482 = vmul.f32 %v1466, %v1402
    %v1483 = vmul.f32 %v1467, %v1403
    %v1484 = vsub.f32 2.0, %v1452
    %v1485 = vsub.f32 2.0, %v1453
    %v1486 = vsub.f32 2.0, %v1454
    %v1487 = vsub.f32 2.0, %v1455
    %v1488 = vsub.f32 2.0, %v1456
    %v1489 = vsub.f32 2.0, %v1457
    %v1490 = vsub.f32 2.0, %v1458
    %v1491 = vsub.f32 2.0, %v1459
    %v1492 = vsub.f32 2.0, %v1460
    %v1493 = vsub.f32 2.0, %v1461
    %v1494 = vsub.f32 2.0, %v1462
    %v1495 = vsub.f32 2.0, %v1463
    %v1496 = vsub.f32 2.0, %v1464
    %v1497 = vsub.f32 2.0, %v1465
    %v1498 = vsub.f32 2.0, %v1466
    %v1499 = vsub.f32 2.0, %v1467
    %v1500 = vmul.f32 %v1484, %v1448
    %v1501 = vmul.f32 %v1485, %v1446
    %v1502 = vmul.f32 %v1486, %v1444
    %v1503 = vmul.f32 %v1487, %v1442
    %v1504 = vmul.f32 %v1488, %v1440
    %v1505 = vmul.f32 %v1489, %v1438
    %v1506 = vmul.f32 %v1490, %v1436
    %v1507 = vmul.f32 %v1491, %v1450
    %v1508 = vmul.f32 %v1492, %v1449
    %v1509 = vmul.f32 %v1493, %v1447
    %v1510 = vmul.f32 %v1494, %v1445
    %v1511 = vmul.f32 %v1495, %v1443
    %v1512 = vmul.f32 %v1496, %v1441
    %v1513 = vmul.f32 %v1497, %v1439
    %v1514 = vmul.f32 %v1498, %v1437
    %v1515 = vmul.f32 %v1499, %v1451
    %v1516 = vadd.f32 %v1468, %v1500
    %v1517 = vadd.f32 %v1469, %v1501
    %v1518 = vadd.f32 %v1470, %v1502
    %v1519 = vadd.f32 %v1471, %v1503
    %v1520 = vadd.f32 %v1472, %v1504
    %v1521 = vadd.f32 %v1473, %v1505
    %v1522 = vadd.f32 %v1474, %v1506
    %v1523 = vadd.f32 %v1475, %v1507
    %v1524 = vadd.f32 %v1476, %v1508
    %v1525 = vadd.f32 %v1477, %v1509
    %v1526 = vadd.f32 %v1478, %v1510
    %v1527 = vadd.f32 %v1479, %v1511
    %v1528 = vadd.f32 %v1480, %v1512
    %v1529 = vadd.f32 %v1481, %v1513
    %v1530 = vadd.f32 %v1482, %v1514
    %v1531 = vadd.f32 %v1483, %v1515
    %1532 = vrot.lane.b32.xlu0 %v1516, 64
    %v1533 = vpop.permute.xlu0 %1532
    %1534 = vrot.lane.b32.xlu0 %v1524, 64
    %v1535 = vpop.permute.xlu0 %1534
    %1536 = vrot.lane.b32.xlu0 %v1517, 64
    %v1537 = vpop.permute.xlu0 %1536
    %1538 = vrot.lane.b32.xlu0 %v1525, 64
    %v1539 = vpop.permute.xlu0 %1538
    %1540 = vrot.lane.b32.xlu0 %v1518, 64
    %v1541 = vpop.permute.xlu0 %1540
    %1542 = vrot.lane.b32.xlu0 %v1526, 64
    %v1543 = vpop.permute.xlu0 %1542
    %1544 = vrot.lane.b32.xlu0 %v1519, 64
    %v1545 = vpop.permute.xlu0 %1544
    %1546 = vrot.lane.b32.xlu0 %v1527, 64
    %v1547 = vpop.permute.xlu0 %1546
    %1548 = vrot.lane.b32.xlu0 %v1520, 64
    %v1549 = vpop.permute.xlu0 %1548
    %1550 = vrot.lane.b32.xlu0 %v1528, 64
    %v1551 = vpop.permute.xlu0 %1550
    %1552 = vrot.lane.b32.xlu0 %v1521, 64
    %v1553 = vpop.permute.xlu0 %1552
    %1554 = vrot.lane.b32.xlu0 %v1529, 64
    %v1555 = vpop.permute.xlu0 %1554
    %1556 = vrot.lane.b32.xlu0 %v1522, 64
    %v1557 = vpop.permute.xlu0 %1556
    %1558 = vrot.lane.b32.xlu0 %v1530, 64
    %v1559 = vpop.permute.xlu0 %1558
    %1560 = vrot.lane.b32.xlu0 %v1523, 64
    %v1561 = vpop.permute.xlu0 %1560
    %1562 = vrot.lane.b32.xlu0 %v1531, 64
    %v1563 = vpop.permute.xlu0 %1562
    %v1564 = vsel %vm1371, %v1557, %v1561
    %v1565 = vsel %vm1371, %v1559, %v1563
    %v1566 = vsel %vm1371, %v1553, %v1557
    %v1567 = vsel %vm1371, %v1555, %v1559
    %v1568 = vsel %vm1371, %v1549, %v1553
    %v1569 = vsel %vm1371, %v1551, %v1555
    %v1570 = vsel %vm1371, %v1545, %v1549
    %v1571 = vsel %vm1371, %v1547, %v1551
    %v1572 = vsel %vm1371, %v1541, %v1545
    %v1573 = vsel %vm1371, %v1543, %v1547
    %v1574 = vsel %vm1371, %v1537, %v1541
    %v1575 = vsel %vm1371, %v1539, %v1543
    %v1576 = vsel %vm1371, %v1533, %v1537
    %v1577 = vsel %vm1371, %v1535, %v1539
    %v1578 = vsel %vm1371, %v1561, %v1533
    %v1579 = vsel %vm1371, %v1563, %v1535
    %v1580 = vmul.f32 %v1275, 1.2499998
    %v1581 = vmul.f32 %v1277, 1.2499998
    %v1582 = vmul.f32 %v1279, 1.2499998
    %v1583 = vmul.f32 %v1281, 1.2499998
    %v1584 = vmul.f32 %v1283, 1.2499998
    %v1585 = vmul.f32 %v1285, 1.2499998
    %v1586 = vmul.f32 %v1287, 1.2499998
    %v1587 = vmul.f32 %v1289, 1.2499998
    %v1588 = vmul.f32 %v1276, 1.2499998
    %v1589 = vmul.f32 %v1278, 1.2499998
    %v1590 = vmul.f32 %v1280, 1.2499998
    %v1591 = vmul.f32 %v1282, 1.2499998
    %v1592 = vmul.f32 %v1284, 1.2499998
    %v1593 = vmul.f32 %v1286, 1.2499998
    %v1594 = vmul.f32 %v1288, 1.2499998
    %v1595 = vmul.f32 %v1290, 1.2499998
    %v1596 = vmul.f32 %v1580, %v1516
    %v1597 = vmul.f32 %v1581, %v1517
    %v1598 = vmul.f32 %v1582, %v1518
    %v1599 = vmul.f32 %v1583, %v1519
    %v1600 = vmul.f32 %v1584, %v1520
    %v1601 = vmul.f32 %v1585, %v1521
    %v1602 = vmul.f32 %v1586, %v1522
    %v1603 = vmul.f32 %v1587, %v1523
    %v1604 = vmul.f32 %v1588, %v1524
    %v1605 = vmul.f32 %v1589, %v1525
    %v1606 = vmul.f32 %v1590, %v1526
    %v1607 = vmul.f32 %v1591, %v1527
    %v1608 = vmul.f32 %v1592, %v1528
    %v1609 = vmul.f32 %v1593, %v1529
    %v1610 = vmul.f32 %v1594, %v1530
    %v1611 = vmul.f32 %v1595, %v1531
    %v1612 = vsub.f32 1.5, %v1580
    %v1613 = vsub.f32 1.5, %v1581
    %v1614 = vsub.f32 1.5, %v1582
    %v1615 = vsub.f32 1.5, %v1583
    %v1616 = vsub.f32 1.5, %v1584
    %v1617 = vsub.f32 1.5, %v1585
    %v1618 = vsub.f32 1.5, %v1586
    %v1619 = vsub.f32 1.5, %v1587
    %v1620 = vsub.f32 1.5, %v1588
    %v1621 = vsub.f32 1.5, %v1589
    %v1622 = vsub.f32 1.5, %v1590
    %v1623 = vsub.f32 1.5, %v1591
    %v1624 = vsub.f32 1.5, %v1592
    %v1625 = vsub.f32 1.5, %v1593
    %v1626 = vsub.f32 1.5, %v1594
    %v1627 = vsub.f32 1.5, %v1595
    %v1628 = vmul.f32 %v1612, %v1576
    %v1629 = vmul.f32 %v1613, %v1574
    %v1630 = vmul.f32 %v1614, %v1572
    %v1631 = vmul.f32 %v1615, %v1570
    %v1632 = vmul.f32 %v1616, %v1568
    %v1633 = vmul.f32 %v1617, %v1566
    %v1634 = vmul.f32 %v1618, %v1564
    %v1635 = vmul.f32 %v1619, %v1578
    %v1636 = vmul.f32 %v1620, %v1577
    %v1637 = vmul.f32 %v1621, %v1575
    %v1638 = vmul.f32 %v1622, %v1573
    %v1639 = vmul.f32 %v1623, %v1571
    %v1640 = vmul.f32 %v1624, %v1569
    %v1641 = vmul.f32 %v1625, %v1567
    %v1642 = vmul.f32 %v1626, %v1565
    %v1643 = vmul.f32 %v1627, %v1579
    %v1644 = vadd.f32 %v1596, %v1628
    %v1645 = vadd.f32 %v1597, %v1629
    %v1646 = vadd.f32 %v1598, %v1630
    %v1647 = vadd.f32 %v1599, %v1631
    %v1648 = vadd.f32 %v1600, %v1632
    %v1649 = vadd.f32 %v1601, %v1633
    %v1650 = vadd.f32 %v1602, %v1634
    %v1651 = vadd.f32 %v1603, %v1635
    %v1652 = vadd.f32 %v1604, %v1636
    %v1653 = vadd.f32 %v1605, %v1637
    %v1654 = vadd.f32 %v1606, %v1638
    %v1655 = vadd.f32 %v1607, %v1639
    %v1656 = vadd.f32 %v1608, %v1640
    %v1657 = vadd.f32 %v1609, %v1641
    %v1658 = vadd.f32 %v1610, %v1642
    %v1659 = vadd.f32 %v1611, %v1643
    %1660 = vrot.lane.b32.xlu0 %v1644, 64
    %v1661 = vpop.permute.xlu0 %1660
    %1662 = vrot.lane.b32.xlu0 %v1652, 64
    %v1663 = vpop.permute.xlu0 %1662
    %1664 = vrot.lane.b32.xlu0 %v1645, 64
    %v1665 = vpop.permute.xlu0 %1664
    %1666 = vrot.lane.b32.xlu0 %v1653, 64
    %v1667 = vpop.permute.xlu0 %1666
    %1668 = vrot.lane.b32.xlu0 %v1646, 64
    %v1669 = vpop.permute.xlu0 %1668
    %1670 = vrot.lane.b32.xlu0 %v1654, 64
    %v1671 = vpop.permute.xlu0 %1670
    %1672 = vrot.lane.b32.xlu0 %v1647, 64
    %v1673 = vpop.permute.xlu0 %1672
    %1674 = vrot.lane.b32.xlu0 %v1655, 64
    %v1675 = vpop.permute.xlu0 %1674
    %1676 = vrot.lane.b32.xlu0 %v1648, 64
    %v1677 = vpop.permute.xlu0 %1676
    %1678 = vrot.lane.b32.xlu0 %v1656, 64
    %v1679 = vpop.permute.xlu0 %1678
    %1680 = vrot.lane.b32.xlu0 %v1649, 64
    %v1681 = vpop.permute.xlu0 %1680
    %1682 = vrot.lane.b32.xlu0 %v1657, 64
    %v1683 = vpop.permute.xlu0 %1682
    %1684 = vrot.lane.b32.xlu0 %v1650, 64
    %v1685 = vpop.permute.xlu0 %1684
    %1686 = vrot.lane.b32.xlu0 %v1658, 64
    %v1687 = vpop.permute.xlu0 %1686
    %1688 = vrot.lane.b32.xlu0 %v1651, 64
    %v1689 = vpop.permute.xlu0 %1688
    %1690 = vrot.lane.b32.xlu0 %v1659, 64
    %v1691 = vpop.permute.xlu0 %1690
    %v1692 = vsel %vm1371, %v1685, %v1689
    %v1693 = vsel %vm1371, %v1687, %v1691
    %v1694 = vsel %vm1371, %v1681, %v1685
    %v1695 = vsel %vm1371, %v1683, %v1687
    %v1696 = vsel %vm1371, %v1677, %v1681
    %v1697 = vsel %vm1371, %v1679, %v1683
    %v1698 = vsel %vm1371, %v1673, %v1677
    %v1699 = vsel %vm1371, %v1675, %v1679
    %v1700 = vsel %vm1371, %v1669, %v1673
    %v1701 = vsel %vm1371, %v1671, %v1675
    %v1702 = vsel %vm1371, %v1665, %v1669
    %v1703 = vsel %vm1371, %v1667, %v1671
    %v1704 = vsel %vm1371, %v1661, %v1665
    %v1705 = vsel %vm1371, %v1663, %v1667
    %v1706 = vsel %vm1371, %v1689, %v1661
    %v1707 = vsel %vm1371, %v1691, %v1663
    %v1708 = vmul.f32 %v1275, 0.83333313
    %v1709 = vmul.f32 %v1277, 0.83333313
    %v1710 = vmul.f32 %v1279, 0.83333313
    %v1711 = vmul.f32 %v1281, 0.83333313
    %v1712 = vmul.f32 %v1283, 0.83333313
    %v1713 = vmul.f32 %v1285, 0.83333313
    %v1714 = vmul.f32 %v1287, 0.83333313
    %v1715 = vmul.f32 %v1289, 0.83333313
    %v1716 = vmul.f32 %v1276, 0.83333313
    %v1717 = vmul.f32 %v1278, 0.83333313
    %v1718 = vmul.f32 %v1280, 0.83333313
    %v1719 = vmul.f32 %v1282, 0.83333313
    %v1720 = vmul.f32 %v1284, 0.83333313
    %v1721 = vmul.f32 %v1286, 0.83333313
    %v1722 = vmul.f32 %v1288, 0.83333313
    %v1723 = vmul.f32 %v1290, 0.83333313
    %v1724 = vmul.f32 %v1708, %v1644
    %v1725 = vmul.f32 %v1709, %v1645
    %v1726 = vmul.f32 %v1710, %v1646
    %v1727 = vmul.f32 %v1711, %v1647
    %v1728 = vmul.f32 %v1712, %v1648
    %v1729 = vmul.f32 %v1713, %v1649
    %v1730 = vmul.f32 %v1714, %v1650
    %v1731 = vmul.f32 %v1715, %v1651
    %v1732 = vmul.f32 %v1716, %v1652
    %v1733 = vmul.f32 %v1717, %v1653
    %v1734 = vmul.f32 %v1718, %v1654
    %v1735 = vmul.f32 %v1719, %v1655
    %v1736 = vmul.f32 %v1720, %v1656
    %v1737 = vmul.f32 %v1721, %v1657
    %v1738 = vmul.f32 %v1722, %v1658
    %v1739 = vmul.f32 %v1723, %v1659
    %v1740 = vsub.f32 1.3333334, %v1708
    %v1741 = vsub.f32 1.3333334, %v1709
    %v1742 = vsub.f32 1.3333334, %v1710
    %v1743 = vsub.f32 1.3333334, %v1711
    %v1744 = vsub.f32 1.3333334, %v1712
    %v1745 = vsub.f32 1.3333334, %v1713
    %v1746 = vsub.f32 1.3333334, %v1714
    %v1747 = vsub.f32 1.3333334, %v1715
    %v1748 = vsub.f32 1.3333334, %v1716
    %v1749 = vsub.f32 1.3333334, %v1717
    %v1750 = vsub.f32 1.3333334, %v1718
    %v1751 = vsub.f32 1.3333334, %v1719
    %v1752 = vsub.f32 1.3333334, %v1720
    %v1753 = vsub.f32 1.3333334, %v1721
    %v1754 = vsub.f32 1.3333334, %v1722
    %v1755 = vsub.f32 1.3333334, %v1723
    %v1756 = vmul.f32 %v1740, %v1704
    %v1757 = vmul.f32 %v1741, %v1702
    %v1758 = vmul.f32 %v1742, %v1700
    %v1759 = vmul.f32 %v1743, %v1698
    %v1760 = vmul.f32 %v1744, %v1696
    %v1761 = vmul.f32 %v1745, %v1694
    %v1762 = vmul.f32 %v1746, %v1692
    %v1763 = vmul.f32 %v1747, %v1706
    %v1764 = vmul.f32 %v1748, %v1705
    %v1765 = vmul.f32 %v1749, %v1703
    %v1766 = vmul.f32 %v1750, %v1701
    %v1767 = vmul.f32 %v1751, %v1699
    %v1768 = vmul.f32 %v1752, %v1697
    %v1769 = vmul.f32 %v1753, %v1695
    %v1770 = vmul.f32 %v1754, %v1693
    %v1771 = vmul.f32 %v1755, %v1707
    %v1772 = vadd.f32 %v1724, %v1756
    %v1773 = vadd.f32 %v1725, %v1757
    %v1774 = vadd.f32 %v1726, %v1758
    %v1775 = vadd.f32 %v1727, %v1759
    %v1776 = vadd.f32 %v1728, %v1760
    %v1777 = vadd.f32 %v1729, %v1761
    %v1778 = vadd.f32 %v1730, %v1762
    %v1779 = vadd.f32 %v1731, %v1763
    %v1780 = vadd.f32 %v1732, %v1764
    %v1781 = vadd.f32 %v1733, %v1765
    %v1782 = vadd.f32 %v1734, %v1766
    %v1783 = vadd.f32 %v1735, %v1767
    %v1784 = vadd.f32 %v1736, %v1768
    %v1785 = vadd.f32 %v1737, %v1769
    %v1786 = vadd.f32 %v1738, %v1770
    %v1787 = vadd.f32 %v1739, %v1771
    %1788 = vrot.lane.b32.xlu0 %v1772, 64
    %v1789 = vpop.permute.xlu0 %1788
    %1790 = vrot.lane.b32.xlu0 %v1780, 64
    %v1791 = vpop.permute.xlu0 %1790
    %1792 = vrot.lane.b32.xlu0 %v1773, 64
    %v1793 = vpop.permute.xlu0 %1792
    %1794 = vrot.lane.b32.xlu0 %v1781, 64
    %v1795 = vpop.permute.xlu0 %1794
    %1796 = vrot.lane.b32.xlu0 %v1774, 64
    %v1797 = vpop.permute.xlu0 %1796
    %1798 = vrot.lane.b32.xlu0 %v1782, 64
    %v1799 = vpop.permute.xlu0 %1798
    %1800 = vrot.lane.b32.xlu0 %v1775, 64
    %v1801 = vpop.permute.xlu0 %1800
    %1802 = vrot.lane.b32.xlu0 %v1783, 64
    %v1803 = vpop.permute.xlu0 %1802
    %1804 = vrot.lane.b32.xlu0 %v1776, 64
    %v1805 = vpop.permute.xlu0 %1804
    %1806 = vrot.lane.b32.xlu0 %v1784, 64
    %v1807 = vpop.permute.xlu0 %1806
    %1808 = vrot.lane.b32.xlu0 %v1777, 64
    %v1809 = vpop.permute.xlu0 %1808
    %1810 = vrot.lane.b32.xlu0 %v1785, 64
    %v1811 = vpop.permute.xlu0 %1810
    %1812 = vrot.lane.b32.xlu0 %v1778, 64
    %v1813 = vpop.permute.xlu0 %1812
    %1814 = vrot.lane.b32.xlu0 %v1786, 64
    %v1815 = vpop.permute.xlu0 %1814
    %1816 = vrot.lane.b32.xlu0 %v1779, 64
    %v1817 = vpop.permute.xlu0 %1816
    %1818 = vrot.lane.b32.xlu0 %v1787, 64
    %v1819 = vpop.permute.xlu0 %1818
    %v1820 = vsel %vm1371, %v1813, %v1817
    %v1821 = vsel %vm1371, %v1815, %v1819
    %v1822 = vsel %vm1371, %v1809, %v1813
    %v1823 = vsel %vm1371, %v1811, %v1815
    %v1824 = vsel %vm1371, %v1805, %v1809
    %v1825 = vsel %vm1371, %v1807, %v1811
    %v1826 = vsel %vm1371, %v1801, %v1805
    %v1827 = vsel %vm1371, %v1803, %v1807
    %v1828 = vsel %vm1371, %v1797, %v1801
    %v1829 = vsel %vm1371, %v1799, %v1803
    %v1830 = vsel %vm1371, %v1793, %v1797
    %v1831 = vsel %vm1371, %v1795, %v1799
    %v1832 = vsel %vm1371, %v1789, %v1793
    %v1833 = vsel %vm1371, %v1791, %v1795
    %v1834 = vsel %vm1371, %v1817, %v1789
    %v1835 = vsel %vm1371, %v1819, %v1791
    %v1836 = vmul.f32 %v1275, 0.6249999
    %v1837 = vmul.f32 %v1277, 0.6249999
    %v1838 = vmul.f32 %v1279, 0.6249999
    %v1839 = vmul.f32 %v1281, 0.6249999
    %v1840 = vmul.f32 %v1283, 0.6249999
    %v1841 = vmul.f32 %v1285, 0.6249999
    %v1842 = vmul.f32 %v1287, 0.6249999
    %v1843 = vmul.f32 %v1289, 0.6249999
    %v1844 = vmul.f32 %v1276, 0.6249999
    %v1845 = vmul.f32 %v1278, 0.6249999
    %v1846 = vmul.f32 %v1280, 0.6249999
    %v1847 = vmul.f32 %v1282, 0.6249999
    %v1848 = vmul.f32 %v1284, 0.6249999
    %v1849 = vmul.f32 %v1286, 0.6249999
    %v1850 = vmul.f32 %v1288, 0.6249999
    %v1851 = vmul.f32 %v1290, 0.6249999
    %v1852 = vmul.f32 %v1836, %v1772
    %v1853 = vmul.f32 %v1837, %v1773
    %v1854 = vmul.f32 %v1838, %v1774
    %v1855 = vmul.f32 %v1839, %v1775
    %v1856 = vmul.f32 %v1840, %v1776
    %v1857 = vmul.f32 %v1841, %v1777
    %v1858 = vmul.f32 %v1842, %v1778
    %v1859 = vmul.f32 %v1843, %v1779
    %v1860 = vmul.f32 %v1844, %v1780
    %v1861 = vmul.f32 %v1845, %v1781
    %v1862 = vmul.f32 %v1846, %v1782
    %v1863 = vmul.f32 %v1847, %v1783
    %v1864 = vmul.f32 %v1848, %v1784
    %v1865 = vmul.f32 %v1849, %v1785
    %v1866 = vmul.f32 %v1850, %v1786
    %v1867 = vmul.f32 %v1851, %v1787
    %v1868 = vsub.f32 1.25, %v1836
    %v1869 = vsub.f32 1.25, %v1837
    %v1870 = vsub.f32 1.25, %v1838
    %v1871 = vsub.f32 1.25, %v1839
    %v1872 = vsub.f32 1.25, %v1840
    %v1873 = vsub.f32 1.25, %v1841
    %v1874 = vsub.f32 1.25, %v1842
    %v1875 = vsub.f32 1.25, %v1843
    %v1876 = vsub.f32 1.25, %v1844
    %v1877 = vsub.f32 1.25, %v1845
    %v1878 = vsub.f32 1.25, %v1846
    %v1879 = vsub.f32 1.25, %v1847
    %v1880 = vsub.f32 1.25, %v1848
    %v1881 = vsub.f32 1.25, %v1849
    %v1882 = vsub.f32 1.25, %v1850
    %v1883 = vsub.f32 1.25, %v1851
    %v1884 = vmul.f32 %v1868, %v1832
    %v1885 = vmul.f32 %v1869, %v1830
    %v1886 = vmul.f32 %v1870, %v1828
    %v1887 = vmul.f32 %v1871, %v1826
    %v1888 = vmul.f32 %v1872, %v1824
    %v1889 = vmul.f32 %v1873, %v1822
    %v1890 = vmul.f32 %v1874, %v1820
    %v1891 = vmul.f32 %v1875, %v1834
    %v1892 = vmul.f32 %v1876, %v1833
    %v1893 = vmul.f32 %v1877, %v1831
    %v1894 = vmul.f32 %v1878, %v1829
    %v1895 = vmul.f32 %v1879, %v1827
    %v1896 = vmul.f32 %v1880, %v1825
    %v1897 = vmul.f32 %v1881, %v1823
    %v1898 = vmul.f32 %v1882, %v1821
    %v1899 = vmul.f32 %v1883, %v1835
    %v1900 = vadd.f32 %v1852, %v1884
    %v1901 = vadd.f32 %v1853, %v1885
    %v1902 = vadd.f32 %v1854, %v1886
    %v1903 = vadd.f32 %v1855, %v1887
    %v1904 = vadd.f32 %v1856, %v1888
    %v1905 = vadd.f32 %v1857, %v1889
    %v1906 = vadd.f32 %v1858, %v1890
    %v1907 = vadd.f32 %v1859, %v1891
    %v1908 = vadd.f32 %v1860, %v1892
    %v1909 = vadd.f32 %v1861, %v1893
    %v1910 = vadd.f32 %v1862, %v1894
    %v1911 = vadd.f32 %v1863, %v1895
    %v1912 = vadd.f32 %v1864, %v1896
    %v1913 = vadd.f32 %v1865, %v1897
    %v1914 = vadd.f32 %v1866, %v1898
    %v1915 = vadd.f32 %v1867, %v1899
    %1916 = vrot.lane.b32.xlu0 %v1900, 64
    %v1917 = vpop.permute.xlu0 %1916
    %1918 = vrot.lane.b32.xlu0 %v1908, 64
    %v1919 = vpop.permute.xlu0 %1918
    %1920 = vrot.lane.b32.xlu0 %v1901, 64
    %v1921 = vpop.permute.xlu0 %1920
    %1922 = vrot.lane.b32.xlu0 %v1909, 64
    %v1923 = vpop.permute.xlu0 %1922
    %1924 = vrot.lane.b32.xlu0 %v1902, 64
    %v1925 = vpop.permute.xlu0 %1924
    %1926 = vrot.lane.b32.xlu0 %v1910, 64
    %v1927 = vpop.permute.xlu0 %1926
    %1928 = vrot.lane.b32.xlu0 %v1903, 64
    %v1929 = vpop.permute.xlu0 %1928
    %1930 = vrot.lane.b32.xlu0 %v1911, 64
    %v1931 = vpop.permute.xlu0 %1930
    %1932 = vrot.lane.b32.xlu0 %v1904, 64
    %v1933 = vpop.permute.xlu0 %1932
    %1934 = vrot.lane.b32.xlu0 %v1912, 64
    %v1935 = vpop.permute.xlu0 %1934
    %1936 = vrot.lane.b32.xlu0 %v1905, 64
    %v1937 = vpop.permute.xlu0 %1936
    %1938 = vrot.lane.b32.xlu0 %v1913, 64
    %v1939 = vpop.permute.xlu0 %1938
    %1940 = vrot.lane.b32.xlu0 %v1906, 64
    %v1941 = vpop.permute.xlu0 %1940
    %1942 = vrot.lane.b32.xlu0 %v1914, 64
    %v1943 = vpop.permute.xlu0 %1942
    %1944 = vrot.lane.b32.xlu0 %v1907, 64
    %v1945 = vpop.permute.xlu0 %1944
    %1946 = vrot.lane.b32.xlu0 %v1915, 64
    %v1947 = vpop.permute.xlu0 %1946
    %v1948 = vsel %vm1371, %v1941, %v1945
    %v1949 = vsel %vm1371, %v1943, %v1947
    %v1950 = vsel %vm1371, %v1937, %v1941
    %v1951 = vsel %vm1371, %v1939, %v1943
    %v1952 = vsel %vm1371, %v1933, %v1937
    %v1953 = vsel %vm1371, %v1935, %v1939
    %v1954 = vsel %vm1371, %v1929, %v1933
    %v1955 = vsel %vm1371, %v1931, %v1935
    %v1956 = vsel %vm1371, %v1925, %v1929
    %v1957 = vsel %vm1371, %v1927, %v1931
    %v1958 = vsel %vm1371, %v1921, %v1925
    %v1959 = vsel %vm1371, %v1923, %v1927
    %v1960 = vsel %vm1371, %v1917, %v1921
    %v1961 = vsel %vm1371, %v1919, %v1923
    %v1962 = vsel %vm1371, %v1945, %v1917
    %v1963 = vsel %vm1371, %v1947, %v1919
    %v1964 = vmul.f32 %v1275, 0.49999988
    %v1965 = vmul.f32 %v1277, 0.49999988
    %v1966 = vmul.f32 %v1279, 0.49999988
    %v1967 = vmul.f32 %v1281, 0.49999988
    %v1968 = vmul.f32 %v1283, 0.49999988
    %v1969 = vmul.f32 %v1285, 0.49999988
    %v1970 = vmul.f32 %v1287, 0.49999988
    %v1971 = vmul.f32 %v1289, 0.49999988
    %v1972 = vmul.f32 %v1276, 0.49999988
    %v1973 = vmul.f32 %v1278, 0.49999988
    %v1974 = vmul.f32 %v1280, 0.49999988
    %v1975 = vmul.f32 %v1282, 0.49999988
    %v1976 = vmul.f32 %v1284, 0.49999988
    %v1977 = vmul.f32 %v1286, 0.49999988
    %v1978 = vmul.f32 %v1288, 0.49999988
    %v1979 = vmul.f32 %v1290, 0.49999988
    %v1980 = vmul.f32 %v1964, %v1900
    %v1981 = vmul.f32 %v1965, %v1901
    %v1982 = vmul.f32 %v1966, %v1902
    %v1983 = vmul.f32 %v1967, %v1903
    %v1984 = vmul.f32 %v1968, %v1904
    %v1985 = vmul.f32 %v1969, %v1905
    %v1986 = vmul.f32 %v1970, %v1906
    %v1987 = vmul.f32 %v1971, %v1907
    %v1988 = vmul.f32 %v1972, %v1908
    %v1989 = vmul.f32 %v1973, %v1909
    %v1990 = vmul.f32 %v1974, %v1910
    %v1991 = vmul.f32 %v1975, %v1911
    %v1992 = vmul.f32 %v1976, %v1912
    %v1993 = vmul.f32 %v1977, %v1913
    %v1994 = vmul.f32 %v1978, %v1914
    %v1995 = vmul.f32 %v1979, %v1915
    %v1996 = vsub.f32 1.2, %v1964
    %v1997 = vsub.f32 1.2, %v1965
    %v1998 = vsub.f32 1.2, %v1966
    %v1999 = vsub.f32 1.2, %v1967
    %v2000 = vsub.f32 1.2, %v1968
    %v2001 = vsub.f32 1.2, %v1969
    %v2002 = vsub.f32 1.2, %v1970
    %v2003 = vsub.f32 1.2, %v1971
    %v2004 = vsub.f32 1.2, %v1972
    %v2005 = vsub.f32 1.2, %v1973
    %v2006 = vsub.f32 1.2, %v1974
    %v2007 = vsub.f32 1.2, %v1975
    %v2008 = vsub.f32 1.2, %v1976
    %v2009 = vsub.f32 1.2, %v1977
    %v2010 = vsub.f32 1.2, %v1978
    %v2011 = vsub.f32 1.2, %v1979
    %v2012 = vmul.f32 %v1996, %v1960
    %v2013 = vmul.f32 %v1997, %v1958
    %v2014 = vmul.f32 %v1998, %v1956
    %v2015 = vmul.f32 %v1999, %v1954
    %v2016 = vmul.f32 %v2000, %v1952
    %v2017 = vmul.f32 %v2001, %v1950
    %v2018 = vmul.f32 %v2002, %v1948
    %v2019 = vmul.f32 %v2003, %v1962
    %v2020 = vmul.f32 %v2004, %v1961
    %v2021 = vmul.f32 %v2005, %v1959
    %v2022 = vmul.f32 %v2006, %v1957
    %v2023 = vmul.f32 %v2007, %v1955
    %v2024 = vmul.f32 %v2008, %v1953
    %v2025 = vmul.f32 %v2009, %v1951
    %v2026 = vmul.f32 %v2010, %v1949
    %v2027 = vmul.f32 %v2011, %v1963
    %v2028 = vadd.f32 %v1980, %v2012
    %v2029 = vadd.f32 %v1981, %v2013
    %v2030 = vadd.f32 %v1982, %v2014
    %v2031 = vadd.f32 %v1983, %v2015
    %v2032 = vadd.f32 %v1984, %v2016
    %v2033 = vadd.f32 %v1985, %v2017
    %v2034 = vadd.f32 %v1986, %v2018
    %v2035 = vadd.f32 %v1987, %v2019
    %v2036 = vadd.f32 %v1988, %v2020
    %v2037 = vadd.f32 %v1989, %v2021
    %v2038 = vadd.f32 %v1990, %v2022
    %v2039 = vadd.f32 %v1991, %v2023
    %v2040 = vadd.f32 %v1992, %v2024
    %v2041 = vadd.f32 %v1993, %v2025
    %v2042 = vadd.f32 %v1994, %v2026
    %v2043 = vadd.f32 %v1995, %v2027
    %v2044 = vxor.u32 %v1037, 2147483648
    %v2045 = vxor.u32 %v1040, 2147483648
    %v2046 = vmul.f32 %v2044, 1.442695
    %v2047 = vpow.pop %v2046
    %v2048 = vmul.f32 %v2045, 1.442695
    %v2049 = vpow.pop %v2048
    %v2050 = vadd.f32 %v2047, 1.0
    %v2051 = vadd.f32 %v2049, 1.0
    %v2052 = vrcp.pop %v2050
    %v2053 = vmul.f32 1.0, %v2052
    %v2054 = vrcp.pop %v2051
    %v2055 = vmul.f32 1.0, %v2054
    %v2056 = vmul.f32 %v1037, %v2053
    %v2057 = vmul.f32 %v1040, %v2055
    %v2058 = vpack.c.bf16 %v2057, %v2056
    %v2059 = vpack.c.bf16 %v2036, %v2028
    %v2060 = vpack.c.bf16 %v2037, %v2029
    %v2061 = vpack.c.bf16 %v2038, %v2030
    %v2062 = vpack.c.bf16 %v2039, %v2031
    %v2063 = vpack.c.bf16 %v2040, %v2032
    %v2064 = vpack.c.bf16 %v2041, %v2033
    %v2065 = vpack.c.bf16 %v2042, %v2034
    %v2066 = vpack.c.bf16 %v2043, %v2035
    %v2195 = vunpack.c.l.b16 %v1051
    %v2196 = vunpack.c.l.b16 %v1052
    %v2197 = vunpack.c.l.b16 %v1053
    %v2198 = vunpack.c.l.b16 %v1054
    %v2199 = vunpack.c.l.b16 %v1055
    %v2200 = vunpack.c.l.b16 %v1056
    %v2201 = vunpack.c.l.b16 %v1057
    %v2202 = vunpack.c.l.b16 %v1058
    %v2203 = vunpack.c.l.b16 %v1059
    %v2204 = vunpack.c.l.b16 %v1060
    %v2205 = vunpack.c.l.b16 %v1061
    %v2206 = vunpack.c.l.b16 %v1062
    %v2207 = vunpack.c.l.b16 %v1063
    %v2208 = vunpack.c.l.b16 %v1064
    %v2209 = vunpack.c.l.b16 %v1065
    %v2210 = vunpack.c.l.b16 %v1066
    %v2211 = vunpack.c.l.b16 %v1067
    %v2212 = vunpack.c.l.b16 %v1068
    %v2213 = vunpack.c.l.b16 %v1069
    %v2214 = vunpack.c.l.b16 %v1070
    %v2215 = vunpack.c.l.b16 %v1071
    %v2216 = vunpack.c.l.b16 %v1072
    %v2217 = vunpack.c.l.b16 %v1073
    %v2218 = vunpack.c.l.b16 %v1074
    %v2219 = vunpack.c.l.b16 %v1075
    %v2220 = vunpack.c.l.b16 %v1076
    %v2221 = vunpack.c.l.b16 %v1077
    %v2222 = vunpack.c.l.b16 %v1078
    %v2223 = vunpack.c.l.b16 %v1079
    %v2224 = vunpack.c.l.b16 %v1080
    %v2225 = vunpack.c.l.b16 %v1081
    %v2226 = vunpack.c.l.b16 %v1082
    %v2227 = vunpack.c.l.b16 %v1083
    %v2228 = vunpack.c.l.b16 %v1084
    %v2229 = vunpack.c.l.b16 %v1085
    %v2230 = vunpack.c.l.b16 %v1086
    %v2231 = vunpack.c.l.b16 %v1087
    %v2232 = vunpack.c.l.b16 %v1088
    %v2233 = vunpack.c.l.b16 %v1089
    %v2234 = vunpack.c.l.b16 %v1090
    %v2235 = vunpack.c.l.b16 %v1091
    %v2236 = vunpack.c.l.b16 %v1092
    %v2237 = vunpack.c.l.b16 %v1093
    %v2238 = vunpack.c.l.b16 %v1094
    %v2239 = vunpack.c.l.b16 %v1095
    %v2240 = vunpack.c.l.b16 %v1096
    %v2241 = vunpack.c.l.b16 %v1097
    %v2242 = vunpack.c.l.b16 %v1098
    %v2243 = vunpack.c.l.b16 %v1099
    %v2244 = vunpack.c.l.b16 %v1100
    %v2245 = vunpack.c.l.b16 %v1101
    %v2246 = vunpack.c.l.b16 %v1102
    %v2247 = vunpack.c.l.b16 %v1103
    %v2248 = vunpack.c.l.b16 %v1104
    %v2249 = vunpack.c.l.b16 %v1105
    %v2250 = vunpack.c.l.b16 %v1106
    %v2251 = vunpack.c.l.b16 %v1107
    %v2252 = vunpack.c.l.b16 %v1108
    %v2253 = vunpack.c.l.b16 %v1109
    %v2254 = vunpack.c.l.b16 %v1110
    %v2255 = vunpack.c.l.b16 %v1111
    %v2256 = vunpack.c.l.b16 %v1112
    %v2257 = vunpack.c.l.b16 %v1113
    %v2258 = vunpack.c.l.b16 %v1114
    %v2259 = vunpack.c.l.b16 %v1115
    %v2260 = vunpack.c.l.b16 %v1116
    %v2261 = vunpack.c.l.b16 %v1117
    %v2262 = vunpack.c.l.b16 %v1118
    %v2263 = vunpack.c.l.b16 %v1119
    %v2264 = vunpack.c.l.b16 %v1120
    %v2265 = vunpack.c.l.b16 %v1121
    %v2266 = vunpack.c.l.b16 %v1122
    %v2267 = vunpack.c.l.b16 %v1123
    %v2268 = vunpack.c.l.b16 %v1124
    %v2269 = vunpack.c.l.b16 %v1125
    %v2270 = vunpack.c.l.b16 %v1126
    %v2271 = vunpack.c.l.b16 %v1127
    %v2272 = vunpack.c.l.b16 %v1128
    %v2273 = vunpack.c.l.b16 %v1129
    %v2274 = vunpack.c.l.b16 %v1130
    %v2275 = vunpack.c.l.b16 %v1131
    %v2276 = vunpack.c.l.b16 %v1132
    %v2277 = vunpack.c.l.b16 %v1133
    %v2278 = vunpack.c.l.b16 %v1134
    %v2279 = vunpack.c.l.b16 %v1135
    %v2280 = vunpack.c.l.b16 %v1136
    %v2281 = vunpack.c.l.b16 %v1137
    %v2282 = vunpack.c.l.b16 %v1138
    %v2283 = vunpack.c.l.b16 %v1139
    %v2284 = vunpack.c.l.b16 %v1140
    %v2285 = vunpack.c.l.b16 %v1141
    %v2286 = vunpack.c.l.b16 %v1142
    %v2287 = vunpack.c.l.b16 %v1143
    %v2288 = vunpack.c.l.b16 %v1144
    %v2289 = vunpack.c.l.b16 %v1145
    %v2290 = vunpack.c.l.b16 %v1146
    %v2291 = vunpack.c.l.b16 %v1147
    %v2292 = vunpack.c.l.b16 %v1148
    %v2293 = vunpack.c.l.b16 %v1149
    %v2294 = vunpack.c.l.b16 %v1150
    %v2295 = vunpack.c.l.b16 %v1151
    %v2296 = vunpack.c.l.b16 %v1152
    %v2297 = vunpack.c.l.b16 %v1153
    %v2298 = vunpack.c.l.b16 %v1154
    %v2299 = vunpack.c.l.b16 %v1155
    %v2300 = vunpack.c.l.b16 %v1156
    %v2301 = vunpack.c.l.b16 %v1157
    %v2302 = vunpack.c.l.b16 %v1158
    %v2303 = vunpack.c.l.b16 %v1159
    %v2304 = vunpack.c.l.b16 %v1160
    %v2305 = vunpack.c.l.b16 %v1161
    %v2306 = vunpack.c.l.b16 %v1162
    %v2307 = vunpack.c.l.b16 %v1163
    %v2308 = vunpack.c.l.b16 %v1164
    %v2309 = vunpack.c.l.b16 %v1165
    %v2310 = vunpack.c.l.b16 %v1166
    %v2311 = vunpack.c.l.b16 %v1167
    %v2312 = vunpack.c.l.b16 %v1168
    %v2313 = vunpack.c.l.b16 %v1169
    %v2314 = vunpack.c.l.b16 %v1170
    %v2315 = vunpack.c.l.b16 %v1171
    %v2316 = vunpack.c.l.b16 %v1172
    %v2317 = vunpack.c.l.b16 %v1173
    %v2318 = vunpack.c.l.b16 %v1174
    %v2319 = vunpack.c.l.b16 %v1175
    %v2320 = vunpack.c.l.b16 %v1176
    %v2321 = vunpack.c.l.b16 %v1177
    %v2322 = vunpack.c.l.b16 %v1178
    %v2323 = vpack.c.b16 %v2196, %v2195
    %v2324 = vpack.c.b16 %v2198, %v2197
    %v2325 = vpack.c.b16 %v2200, %v2199
    %v2326 = vpack.c.b16 %v2202, %v2201
    %v2327 = vpack.c.b16 %v2204, %v2203
    %v2328 = vpack.c.b16 %v2206, %v2205
    %v2329 = vpack.c.b16 %v2208, %v2207
    %v2330 = vpack.c.b16 %v2210, %v2209
    %v2331 = vpack.c.b16 %v2212, %v2211
    %v2332 = vpack.c.b16 %v2214, %v2213
    %v2333 = vpack.c.b16 %v2216, %v2215
    %v2334 = vpack.c.b16 %v2218, %v2217
    %v2335 = vpack.c.b16 %v2220, %v2219
    %v2336 = vpack.c.b16 %v2222, %v2221
    %v2337 = vpack.c.b16 %v2224, %v2223
    %v2338 = vpack.c.b16 %v2226, %v2225
    %v2339 = vpack.c.b16 %v2228, %v2227
    %v2340 = vpack.c.b16 %v2230, %v2229
    %v2341 = vpack.c.b16 %v2232, %v2231
    %v2342 = vpack.c.b16 %v2234, %v2233
    %v2343 = vpack.c.b16 %v2236, %v2235
    %v2344 = vpack.c.b16 %v2238, %v2237
    %v2345 = vpack.c.b16 %v2240, %v2239
    %v2346 = vpack.c.b16 %v2242, %v2241
    %v2347 = vpack.c.b16 %v2244, %v2243
    %v2348 = vpack.c.b16 %v2246, %v2245
    %v2349 = vpack.c.b16 %v2248, %v2247
    %v2350 = vpack.c.b16 %v2250, %v2249
    %v2351 = vpack.c.b16 %v2252, %v2251
    %v2352 = vpack.c.b16 %v2254, %v2253
    %v2353 = vpack.c.b16 %v2256, %v2255
    %v2354 = vpack.c.b16 %v2258, %v2257
    %v2355 = vpack.c.b16 %v2260, %v2259
    %v2356 = vpack.c.b16 %v2262, %v2261
    %v2357 = vpack.c.b16 %v2264, %v2263
    %v2358 = vpack.c.b16 %v2266, %v2265
    %v2359 = vpack.c.b16 %v2268, %v2267
    %v2360 = vpack.c.b16 %v2270, %v2269
    %v2361 = vpack.c.b16 %v2272, %v2271
    %v2362 = vpack.c.b16 %v2274, %v2273
    %v2363 = vpack.c.b16 %v2276, %v2275
    %v2364 = vpack.c.b16 %v2278, %v2277
    %v2365 = vpack.c.b16 %v2280, %v2279
    %v2366 = vpack.c.b16 %v2282, %v2281
    %v2367 = vpack.c.b16 %v2284, %v2283
    %v2368 = vpack.c.b16 %v2286, %v2285
    %v2369 = vpack.c.b16 %v2288, %v2287
    %v2370 = vpack.c.b16 %v2290, %v2289
    %v2371 = vpack.c.b16 %v2292, %v2291
    %v2372 = vpack.c.b16 %v2294, %v2293
    %v2373 = vpack.c.b16 %v2296, %v2295
    %v2374 = vpack.c.b16 %v2298, %v2297
    %v2375 = vpack.c.b16 %v2300, %v2299
    %v2376 = vpack.c.b16 %v2302, %v2301
    %v2377 = vpack.c.b16 %v2304, %v2303
    %v2378 = vpack.c.b16 %v2306, %v2305
    %v2379 = vpack.c.b16 %v2308, %v2307
    %v2380 = vpack.c.b16 %v2310, %v2309
    %v2381 = vpack.c.b16 %v2312, %v2311
    %v2382 = vpack.c.b16 %v2314, %v2313
    %v2383 = vpack.c.b16 %v2316, %v2315
    %v2384 = vpack.c.b16 %v2318, %v2317
    %v2385 = vpack.c.b16 %v2320, %v2319
    %v2386 = vpack.c.b16 %v2322, %v2321
    %2451 = vmatprep.subr.bf16.mxu0 0
    %2452 = vmatpush1.bf16.msra.mxu0 %v2323
    %2453 = vmatprep.subr.bf16.mxu0 0
    %2454 = vmatpush1.bf16.msra.mxu0 %v2324
    %2455 = vmatprep.subr.bf16.mxu0 0
    %2456 = vmatpush1.bf16.msra.mxu0 %v2325
    %2457 = vmatprep.subr.bf16.mxu0 0
    %2458 = vmatpush1.bf16.msra.mxu0 %v2326
    %2459 = vmatprep.subr.bf16.mxu0 0
    %2460 = vmatpush1.bf16.msra.mxu0 %v2327
    %2461 = vmatprep.subr.bf16.mxu0 0
    %2462 = vmatpush1.bf16.msra.mxu0 %v2328
    %2463 = vmatprep.subr.bf16.mxu0 0
    %2464 = vmatpush1.bf16.msra.mxu0 %v2329
    %2465 = vmatprep.subr.bf16.mxu0 0
    %2466 = vmatpush1.bf16.msra.mxu0 %v2330
    %2467 = vmatprep.subr.bf16.mxu0 0
    %2468 = vmatpush1.bf16.msra.mxu0 %v2331
    %2469 = vmatprep.subr.bf16.mxu0 0
    %2470 = vmatpush1.bf16.msra.mxu0 %v2332
    %2471 = vmatprep.subr.bf16.mxu0 0
    %2472 = vmatpush1.bf16.msra.mxu0 %v2333
    %2473 = vmatprep.subr.bf16.mxu0 0
    %2474 = vmatpush1.bf16.msra.mxu0 %v2334
    %2475 = vmatprep.subr.bf16.mxu0 0
    %2476 = vmatpush1.bf16.msra.mxu0 %v2335
    %2477 = vmatprep.subr.bf16.mxu0 0
    %2478 = vmatpush1.bf16.msra.mxu0 %v2336
    %2479 = vmatprep.subr.bf16.mxu0 0
    %2480 = vmatpush1.bf16.msra.mxu0 %v2337
    %2481 = vmatprep.subr.bf16.mxu0 0
    %2482 = vmatpush1.bf16.msra.mxu0 %v2338
    %2483 = vmatprep.mubr.bf16.mxu0 %v2060
    %2484 = vmatmul.mubr.bf16.gmra.mrb[0].mxu0 %v2059
    %v2485 = vpop.f32.mrb[0].mxu0
    %v2486 = vadd.f32 0.0, %v2485
    %v2487 = vpop.f32.mrb[0].mxu0
    %v2488 = vpop.f32.mrb[0].mxu0
    %v2489 = vadd.f32 0.0, %v2488
    %v2490 = vpop.f32.mrb[0].mxu0
    %2491 = vdwg.mxu0
    %2492 = vmatprep.subr.bf16.mxu0 0
    %2493 = vmatpush1.bf16.msra.mxu0 %v2339
    %2494 = vmatprep.subr.bf16.mxu0 0
    %2495 = vmatpush1.bf16.msra.mxu0 %v2340
    %2496 = vmatprep.subr.bf16.mxu0 0
    %2497 = vmatpush1.bf16.msra.mxu0 %v2341
    %2498 = vmatprep.subr.bf16.mxu0 0
    %2499 = vmatpush1.bf16.msra.mxu0 %v2342
    %2500 = vmatprep.subr.bf16.mxu0 0
    %2501 = vmatpush1.bf16.msra.mxu0 %v2343
    %2502 = vmatprep.subr.bf16.mxu0 0
    %2503 = vmatpush1.bf16.msra.mxu0 %v2344
    %2504 = vmatprep.subr.bf16.mxu0 0
    %2505 = vmatpush1.bf16.msra.mxu0 %v2345
    %2506 = vmatprep.subr.bf16.mxu0 0
    %2507 = vmatpush1.bf16.msra.mxu0 %v2346
    %2508 = vmatprep.subr.bf16.mxu0 0
    %2509 = vmatpush1.bf16.msra.mxu0 %v2347
    %2510 = vmatprep.subr.bf16.mxu0 0
    %2511 = vmatpush1.bf16.msra.mxu0 %v2348
    %2512 = vmatprep.subr.bf16.mxu0 0
    %2513 = vmatpush1.bf16.msra.mxu0 %v2349
    %2514 = vmatprep.subr.bf16.mxu0 0
    %2515 = vmatpush1.bf16.msra.mxu0 %v2350
    %2516 = vmatprep.subr.bf16.mxu0 0
    %2517 = vmatpush1.bf16.msra.mxu0 %v2351
    %2518 = vmatprep.subr.bf16.mxu0 0
    %2519 = vmatpush1.bf16.msra.mxu0 %v2352
    %2520 = vmatprep.subr.bf16.mxu0 0
    %2521 = vmatpush1.bf16.msra.mxu0 %v2353
    %2522 = vmatprep.subr.bf16.mxu0 0
    %2523 = vmatpush1.bf16.msra.mxu0 %v2354
    %2524 = vmatprep.mubr.bf16.mxu0 %v2062
    %2525 = vmatmul.mubr.bf16.gmra.mrb[0].mxu0 %v2061
    %v2526 = vpop.f32.mrb[0].mxu0
    %v2527 = vadd.f32 %v2486, %v2526
    %v2528 = vpop.f32.mrb[0].mxu0
    %v2529 = vpop.f32.mrb[0].mxu0
    %v2530 = vadd.f32 %v2489, %v2529
    %v2531 = vpop.f32.mrb[0].mxu0
    %2532 = vdwg.mxu0
    %2533 = vmatprep.subr.bf16.mxu0 0
    %2534 = vmatpush1.bf16.msra.mxu0 %v2355
    %2535 = vmatprep.subr.bf16.mxu0 0
    %2536 = vmatpush1.bf16.msra.mxu0 %v2356
    %2537 = vmatprep.subr.bf16.mxu0 0
    %2538 = vmatpush1.bf16.msra.mxu0 %v2357
    %2539 = vmatprep.subr.bf16.mxu0 0
    %2540 = vmatpush1.bf16.msra.mxu0 %v2358
    %2541 = vmatprep.subr.bf16.mxu0 0
    %2542 = vmatpush1.bf16.msra.mxu0 %v2359
    %2543 = vmatprep.subr.bf16.mxu0 0
    %2544 = vmatpush1.bf16.msra.mxu0 %v2360
    %2545 = vmatprep.subr.bf16.mxu0 0
    %2546 = vmatpush1.bf16.msra.mxu0 %v2361
    %2547 = vmatprep.subr.bf16.mxu0 0
    %2548 = vmatpush1.bf16.msra.mxu0 %v2362
    %2549 = vmatprep.subr.bf16.mxu0 0
    %2550 = vmatpush1.bf16.msra.mxu0 %v2363
    %2551 = vmatprep.subr.bf16.mxu0 0
    %2552 = vmatpush1.bf16.msra.mxu0 %v2364
    %2553 = vmatprep.subr.bf16.mxu0 0
    %2554 = vmatpush1.bf16.msra.mxu0 %v2365
    %2555 = vmatprep.subr.bf16.mxu0 0
    %2556 = vmatpush1.bf16.msra.mxu0 %v2366
    %2557 = vmatprep.subr.bf16.mxu0 0
    %2558 = vmatpush1.bf16.msra.mxu0 %v2367
    %2559 = vmatprep.subr.bf16.mxu0 0
    %2560 = vmatpush1.bf16.msra.mxu0 %v2368
    %2561 = vmatprep.subr.bf16.mxu0 0
    %2562 = vmatpush1.bf16.msra.mxu0 %v2369
    %2563 = vmatprep.subr.bf16.mxu0 0
    %2564 = vmatpush1.bf16.msra.mxu0 %v2370
    %2565 = vmatprep.mubr.bf16.mxu0 %v2064
    %2566 = vmatmul.mubr.bf16.gmra.mrb[0].mxu0 %v2063
    %v2567 = vpop.f32.mrb[0].mxu0
    %v2568 = vadd.f32 %v2527, %v2567
    %v2569 = vpop.f32.mrb[0].mxu0
    %v2570 = vpop.f32.mrb[0].mxu0
    %v2571 = vadd.f32 %v2530, %v2570
    %v2572 = vpop.f32.mrb[0].mxu0
    %2573 = vdwg.mxu0
    %2574 = vmatprep.subr.bf16.mxu0 0
    %2575 = vmatpush1.bf16.msra.mxu0 %v2371
    %2576 = vmatprep.subr.bf16.mxu0 0
    %2577 = vmatpush1.bf16.msra.mxu0 %v2372
    %2578 = vmatprep.subr.bf16.mxu0 0
    %2579 = vmatpush1.bf16.msra.mxu0 %v2373
    %2580 = vmatprep.subr.bf16.mxu0 0
    %2581 = vmatpush1.bf16.msra.mxu0 %v2374
    %2582 = vmatprep.subr.bf16.mxu0 0
    %2583 = vmatpush1.bf16.msra.mxu0 %v2375
    %2584 = vmatprep.subr.bf16.mxu0 0
    %2585 = vmatpush1.bf16.msra.mxu0 %v2376
    %2586 = vmatprep.subr.bf16.mxu0 0
    %2587 = vmatpush1.bf16.msra.mxu0 %v2377
    %2588 = vmatprep.subr.bf16.mxu0 0
    %2589 = vmatpush1.bf16.msra.mxu0 %v2378
    %2590 = vmatprep.subr.bf16.mxu0 0
    %2591 = vmatpush1.bf16.msra.mxu0 %v2379
    %2592 = vmatprep.subr.bf16.mxu0 0
    %2593 = vmatpush1.bf16.msra.mxu0 %v2380
    %2594 = vmatprep.subr.bf16.mxu0 0
    %2595 = vmatpush1.bf16.msra.mxu0 %v2381
    %2596 = vmatprep.subr.bf16.mxu0 0
    %2597 = vmatpush1.bf16.msra.mxu0 %v2382
    %2598 = vmatprep.subr.bf16.mxu0 0
    %2599 = vmatpush1.bf16.msra.mxu0 %v2383
    %2600 = vmatprep.subr.bf16.mxu0 0
    %2601 = vmatpush1.bf16.msra.mxu0 %v2384
    %2602 = vmatprep.subr.bf16.mxu0 0
    %2603 = vmatpush1.bf16.msra.mxu0 %v2385
    %2604 = vmatprep.subr.bf16.mxu0 0
    %2605 = vmatpush1.bf16.msra.mxu0 %v2386
    %2606 = vmatprep.mubr.bf16.mxu0 %v2066
    %2607 = vmatmul.mubr.bf16.gmra.mrb[0].mxu0 %v2065
    %v2608 = vpop.f32.mrb[0].mxu0
    %v2609 = vadd.f32 %v2568, %v2608
    %v2610 = vpop.f32.mrb[0].mxu0
    %v2611 = vpop.f32.mrb[0].mxu0
    %v2612 = vadd.f32 %v2571, %v2611
    %v2613 = vpop.f32.mrb[0].mxu0
    %2614 = vdwg.mxu0
    %v2623 = vunpack.c.l.b16 %v1043
    %v2624 = vunpack.c.l.b16 %v1044
    %v2625 = vunpack.c.l.b16 %v1045
    %v2626 = vunpack.c.l.b16 %v1046
    %v2627 = vunpack.c.l.b16 %v1047
    %v2628 = vunpack.c.l.b16 %v1048
    %v2629 = vunpack.c.l.b16 %v1049
    %v2630 = vunpack.c.l.b16 %v1050
    %v2631 = vpack.c.b16 %v2624, %v2623
    %v2632 = vpack.c.b16 %v2626, %v2625
    %v2633 = vpack.c.b16 %v2628, %v2627
    %v2634 = vpack.c.b16 %v2630, %v2629
    %v2640 = vsel %vm291, %v2058, 0
    %2642 = vmatprep.subr.bf16.mxu0 0
    %2643 = vmatpush1.bf16.msra.mxu0 %v2631
    %2644 = vmatprep.subr.bf16.mxu0 0
    %2645 = vmatpush1.bf16.msra.mxu0 %v2632
    %2646 = vmatprep.subr.bf16.mxu0 0
    %2647 = vmatpush1.bf16.msra.mxu0 %v2633
    %2648 = vmatprep.subr.bf16.mxu0 0
    %2649 = vmatpush1.bf16.msra.mxu0 %v2634
    %2650 = vmatprep.subr.bf16.mxu0 0
    %2651 = vmatpush1.bf16.msra.mxu0 0
    %2652 = vmatprep.subr.bf16.mxu0 0
    %2653 = vmatpush1.bf16.msra.mxu0 0
    %2654 = vmatprep.subr.bf16.mxu0 0
    %2655 = vmatpush1.bf16.msra.mxu0 0
    %2656 = vmatprep.subr.bf16.mxu0 0
    %2657 = vmatpush1.bf16.msra.mxu0 0
    %2658 = vmatprep.subr.bf16.mxu0 0
    %2659 = vmatpush1.bf16.msra.mxu0 0
    %2660 = vmatprep.subr.bf16.mxu0 0
    %2661 = vmatpush1.bf16.msra.mxu0 0
    %2662 = vmatprep.subr.bf16.mxu0 0
    %2663 = vmatpush1.bf16.msra.mxu0 0
    %2664 = vmatprep.subr.bf16.mxu0 0
    %2665 = vmatpush1.bf16.msra.mxu0 0
    %2666 = vmatprep.subr.bf16.mxu0 0
    %2667 = vmatpush1.bf16.msra.mxu0 0
    %2668 = vmatprep.subr.bf16.mxu0 0
    %2669 = vmatpush1.bf16.msra.mxu0 0
    %2670 = vmatprep.subr.bf16.mxu0 0
    %2671 = vmatpush1.bf16.msra.mxu0 0
    %2672 = vmatprep.subr.bf16.mxu0 0
    %2673 = vmatpush1.bf16.msra.mxu0 0
    %2674 = vmatprep.mubr.bf16.mxu0 0
    %2675 = vmatmul.mubr.bf16.gmra.mrb[0].mxu0 %v2640
    %v2676 = vpop.f32.mrb[0].mxu0
    %v2677 = vadd.f32 %v2609, %v2676
    %v2678 = vpop.f32.mrb[0].mxu0
    %v2679 = vpop.f32.mrb[0].mxu0
    %v2680 = vadd.f32 %v2612, %v2679
    %v2681 = vpop.f32.mrb[0].mxu0
    %2682 = vdwg.mxu0
    %2683 = vst [vmem:[#allocation11] sm:$0xff] %v2677
    %2684 = vst [vmem:[#allocation11 + $0x8] sm:$0xff] %v2680
    // Predicated region
    $region42: #{_kan_forward_packed.1} parent=1 // pred_check
      _
    $region43: #{_kan_forward_packed.1} parent=1 // pred_check_branch
      %2686 = sbr.rel (0) target = $region45
    $region44: #{_kan_forward_packed.1} parent=1 // pred_region
      %s2688 = ssub.s32 256, 256
      %2689 = vsyncadd [#allocation4], %s2688
      %s2690 = sshll.u32 [#allocation11], 4
      %s2691 = int_to_ptr.vmem [resolvable:$true] %s2690
      %2696 = dma.vmem_to_hbm [thread:$0]  %s2691, 256, %s5, [#allocation4], 128, 128, 8
    $region45: #{_kan_forward_packed.1} parent=1 // pred_fallthru
      _
    // Predicated region
    $region46: #{_kan_forward_packed.1} parent=1 // pred_check
      _
    $region47: #{_kan_forward_packed.1} parent=1 // pred_check_branch
      %2698 = sbr.rel (0) target = $region49
    $region48: #{_kan_forward_packed.1} parent=1 // pred_region
      %2699 = dma.done [#allocation4], 256
    $region49: #{_kan_forward_packed.1} parent=1 // pred_fallthru
      _
    %2700 = vsyncpa [#allocation3], 1
    %2701 = vsyncpa [#allocation6], 1
    %2702 = vsyncpa [#allocation9], 1
    %2703 = vsyncpa [#allocation4], 1

</llo_original>
